<compile_context>
chip_gen: v6e
topology: v6e:2x2x1
jax: 0.10.0
libtpu: 0.0.40
codegen_flags: <defaults>
</compile_context>

<pallas_src>
import math

import jax
import jax.numpy as jnp
from jax.experimental import pallas as pl
from jax.experimental.pallas import tpu as pltpu


def mha_pool_kernel(x_ref, wvT_ref, ws_ref, bs_ref, hmT_ref, o_ref):
    TB, L, E = x_ref.shape
    H = ws_ref.shape[1]

    x2 = x_ref[...].reshape(TB * L, E)                                # bf16 (TB*L, E)

    # V projection without bias (bias folded into the hoisted output projection).
    v = jnp.dot(x2, wvT_ref[...],
                preferred_element_type=jnp.float32)                   # (TB*L, E) f32

    # Per-head scores: K projection, q and 1/sqrt(D) are all pre-folded into W_s / b_s.
    s = jnp.dot(x2, ws_ref[...],
                preferred_element_type=jnp.float32) + bs_ref[...]     # (TB*L, H) f32
    s3 = s.reshape(TB, L, H)

    # Softmax over the sequence axis (per batch element, per head).
    m = jnp.max(s3, axis=1, keepdims=True)                            # (TB, 1, H)
    p = jnp.exp(s3 - m)                                               # (TB, L, H)
    denom = jnp.sum(p, axis=1, keepdims=True)                         # (TB, 1, H)
    p = p * pl.reciprocal(denom, approx=True)                         # EUP divide

    # Expand per-head weights to per-channel with the exact one-hot (H, E) matrix, then
    # do the weighted sum over L on the VPU (lane layout stays E-wide throughout).
    pe = jnp.dot(p.reshape(TB * L, H), hmT_ref[...],
                 preferred_element_type=jnp.float32)                  # (TB*L, E)
    pooled = jnp.sum((pe * v).reshape(TB, L, E), axis=1)              # (TB, E)

    o_ref[...] = pooled.astype(o_ref.dtype)                           # lane-dense slab store


def _fold_params(params, num_heads):
    """Algebraic folding of the Q/K projections and the biases (done once, in XLA)."""
    E = params["query"].shape[1]
    H = num_heads
    D = E // H
    scale = 1.0 / math.sqrt(D)
    f32 = jnp.float32

    query = params["query"].astype(f32)                               # (1, E)
    wq, wk, wv, wo = (params[k].astype(f32) for k in ("wq", "wk", "wv", "wo"))
    bq, bk, bv, bo = (params[k].astype(f32) for k in ("bq", "bk", "bv", "bo"))

    q = (query @ wq.T + bq.reshape(1, E)) * scale                     # (1, E), batch-invariant
    head_ids = jnp.arange(E) // D
    hm = (head_ids[:, None] == jnp.arange(H)[None, :]).astype(f32)    # (E, H) one-hot

    w_s = wk.T @ (q[0][:, None] * hm)                                 # (E, H): scores = x@w_s+b_s
    b_s = ((bk * q[0]) @ hm).reshape(1, H)                            # (1, H)
    bo_eff = (bv @ wo.T + bo).reshape(1, E)                           # bv folded (softmax sums to 1)

    return dict(wvT=wv.T, w_s=w_s, b_s=b_s, hmT=hm.T, wo=wo, bo_eff=bo_eff)


def multi_head_attention_pool(x_lne, params, num_heads, *, block_batch=32):
    """x_lne: (L, N, E) float32 (PyTorch MultiheadAttention seq-major layout). Returns (N, E)."""
    L, N, E = x_lne.shape
    H = num_heads
    f = _fold_params(params, num_heads)

    TB = block_batch                                                  # batch elements per grid step
    n_pad = ((N + TB - 1) // TB) * TB
    x_nle = jnp.transpose(x_lne, (1, 0, 2)).astype(jnp.float32)       # (N, L, E)
    if n_pad != N:
        x_nle = jnp.pad(x_nle, ((0, n_pad - N), (0, 0), (0, 0)))      # zero rows are discarded later

    # bf16 operands for the MXU matmuls (f32 accumulation inside the kernel);
    # also halves the HBM bytes of the x stream.
    x_bf = x_nle.astype(jnp.bfloat16)
    wvT_bf = f["wvT"].astype(jnp.bfloat16)
    ws_bf = f["w_s"].astype(jnp.bfloat16)

    pooled = pl.pallas_call(
        mha_pool_kernel,
        out_shape=jax.ShapeDtypeStruct((n_pad, E), jnp.float32),
        grid=(n_pad // TB,),
        in_specs=[
            pl.BlockSpec((TB, L, E), lambda b: (b, 0, 0)),            # x: TB sequences per step
            pl.BlockSpec((E, E), lambda b: (0, 0)),                   # Wv^T (resident)
            pl.BlockSpec((E, H), lambda b: (0, 0)),                   # folded score weights
            pl.BlockSpec((1, H), lambda b: (0, 0)),                   # folded score bias
            pl.BlockSpec((H, E), lambda b: (0, 0)),                   # one-hot head expansion
        ],
        out_specs=pl.BlockSpec((TB, E), lambda b: (b, 0)),            # lane-dense (TB, E) output
        compiler_params=pltpu.CompilerParams(
            dimension_semantics=("parallel",),                        # grid >= 2 -> both v7x cores
            vmem_limit_bytes=32 * 1024 * 1024,
        ),
    )(x_bf, wvT_bf, ws_bf, f["b_s"], f["hmT"])

    pooled = pooled[:N]
    # Output projection hoisted out of the kernel: one batched XLA matmul over all N rows.
    return pooled @ f["wo"].T + f["bo_eff"]


def ref_forward(x_lne, query, wq, wk, wv, wo, bq, bk, bv, bo, num_heads):
    """Pure f32 reference of nn.MultiheadAttention with a repeated single learned query."""
    L, N, E = x_lne.shape
    D = E // num_heads
    q = (query @ wq.T + bq).reshape(num_heads, D)                     # (H, D)
    k = jnp.einsum("lne,fe->lnf", x_lne, wk) + bk
    v = jnp.einsum("lne,fe->lnf", x_lne, wv) + bv
    kh = k.reshape(L, N, num_heads, D)
    vh = v.reshape(L, N, num_heads, D)
    s = jnp.einsum("hd,lnhd->nhl", q, kh) / math.sqrt(D)
    p = jax.nn.softmax(s, axis=-1)
    o = jnp.einsum("nhl,lnhd->nhd", p, vh).reshape(N, E)
    return o @ wo.T + bo


def ref_matched(x_lne, params, num_heads):
    """Reference using the SAME folding + bf16 matmul inputs as the kernel (tight check)."""
    f = _fold_params(params, num_heads)
    x = jnp.transpose(x_lne, (1, 0, 2)).astype(jnp.bfloat16)          # (N, L, E)
    v = jnp.einsum("nle,ef->nlf", x, f["wvT"].astype(jnp.bfloat16),
                   preferred_element_type=jnp.float32)
    s = jnp.einsum("nle,eh->nlh", x, f["w_s"].astype(jnp.bfloat16),
                   preferred_element_type=jnp.float32) + f["b_s"]
    p = jax.nn.softmax(s, axis=1)
    pe = jnp.einsum("nlh,he->nle", p, f["hmT"])
    pooled = jnp.sum(pe * v, axis=1)
    return pooled @ f["wo"].T + f["bo_eff"]


if __name__ == "__main__":
    L, N, E, H = 8, 64, 32, 4   # seq, batch, embed_dim, num_heads (TB=32 -> grid of 2, TB*L=256)

    key = jax.random.PRNGKey(0)
    ks = jax.random.split(key, 6)
    x = jax.random.normal(ks[0], (L, N, E), jnp.float32)              # (L, N, E)

    # Deterministic synthetic parameters (shapes match nn.MultiheadAttention).
    query = jax.random.normal(ks[1], (1, E), jnp.float32)
    in_proj_w = jax.random.normal(ks[2], (3 * E, E), jnp.float32) / math.sqrt(E)
    in_proj_b = 0.02 * jax.random.normal(ks[3], (3 * E,), jnp.float32)
    wo = jax.random.normal(ks[4], (E, E), jnp.float32) / math.sqrt(E)
    bo = 0.02 * jax.random.normal(ks[5], (E,), jnp.float32)
    wq, wk, wv = in_proj_w[:E], in_proj_w[E:2 * E], in_proj_w[2 * E:]
    bq, bk, bv = in_proj_b[:E], in_proj_b[E:2 * E], in_proj_b[2 * E:]

    params = dict(query=query, wq=wq, wk=wk, wv=wv, bq=bq, bk=bk, bv=bv, wo=wo, bo=bo)

    out = multi_head_attention_pool(x, params, H, block_batch=32)
    out = jax.block_until_ready(out)
    assert out.shape == (N, E), out.shape

    # Tight check: same folding + same bf16 matmul operands as the kernel -> isolates kernel bugs
    # (only accumulation order and the EUP approx-reciprocal differ).
    tight = ref_matched(x, params, H)
    assert jnp.allclose(out, tight, atol=5e-3, rtol=5e-3), float(jnp.max(jnp.abs(out - tight)))

    # Module-semantics check vs. full-f32 reference; tolerance reflects bf16 matmul inputs
    # (f32 accumulation), which is the standard TPU MXU precision for this forward pass.
    ref = ref_forward(x, query, wq, wk, wv, wo, bq, bk, bv, bo, H)
    assert jnp.allclose(out, ref, atol=3e-2, rtol=3e-2), float(jnp.max(jnp.abs(out - ref)))

    print("KERNEL_OK")
</pallas_src>

<mosaic_0001>
module attributes {stable_mosaic.version = 11 : i64} {
  func.func @mha_pool_kernel(%arg0: i32, %arg1: memref<32x8x32xbf16, #tpu.memory_space<vmem>>, %arg2: memref<32x32xbf16, #tpu.memory_space<vmem>>, %arg3: memref<32x4xbf16, #tpu.memory_space<vmem>>, %arg4: memref<1x4xf32, #tpu.memory_space<vmem>>, %arg5: memref<4x32xf32, #tpu.memory_space<vmem>>, %arg6: memref<32x32xf32, #tpu.memory_space<vmem>>) attributes {dimension_semantics = [#tpu.dimension_semantics<parallel>], iteration_bounds = array<i64: 2>, scalar_prefetch = 0 : i64, scratch_operands = 0 : i64, tpu.core_type = #tpu.core_type<tc>, window_params = [{transform_indices = @transform_0, window_bounds = array<i64: 32, 8, 32>}, {pipeline_mode = #tpu.pipeline_mode<synchronous>, transform_indices = @transform_1, window_bounds = array<i64: 32, 32>}, {pipeline_mode = #tpu.pipeline_mode<synchronous>, transform_indices = @transform_2, window_bounds = array<i64: 32, 4>}, {pipeline_mode = #tpu.pipeline_mode<synchronous>, transform_indices = @transform_3, window_bounds = array<i64: 1, 4>}, {pipeline_mode = #tpu.pipeline_mode<synchronous>, transform_indices = @transform_4, window_bounds = array<i64: 4, 32>}, {transform_indices = @transform_5, window_bounds = array<i64: 32, 32>}]} {
    %c0 = arith.constant 0 : index
    %c0_0 = arith.constant 0 : index
    %c0_1 = arith.constant 0 : index
    %0 = vector.load %arg1[%c0, %c0_0, %c0_1] : memref<32x8x32xbf16, #tpu.memory_space<vmem>>, vector<32x8x32xbf16>
    %1 = vector.shape_cast %0 : vector<32x8x32xbf16> to vector<256x32xbf16>
    %c0_2 = arith.constant 0 : index
    %c0_3 = arith.constant 0 : index
    %2 = vector.load %arg2[%c0_2, %c0_3] : memref<32x32xbf16, #tpu.memory_space<vmem>>, vector<32x32xbf16>
    %cst = arith.constant dense<0.000000e+00> : vector<256x32xf32>
    %3 = tpu.matmul %1, %2, %cst {dimension_numbers = #tpu.dot_dimension_numbers<[1], [0], [0], [1], [0, 0, 1, 1], [], []>} : vector<256x32xbf16>, vector<32x32xbf16>, vector<256x32xf32> -> vector<256x32xf32>
    %c0_4 = arith.constant 0 : index
    %c0_5 = arith.constant 0 : index
    %4 = vector.load %arg3[%c0_4, %c0_5] : memref<32x4xbf16, #tpu.memory_space<vmem>>, vector<32x4xbf16>
    %cst_6 = arith.constant dense<0.000000e+00> : vector<256x4xf32>
    %5 = tpu.matmul %1, %4, %cst_6 {dimension_numbers = #tpu.dot_dimension_numbers<[1], [0], [0], [1], [0, 0, 1, 1], [], []>} : vector<256x32xbf16>, vector<32x4xbf16>, vector<256x4xf32> -> vector<256x4xf32>
    %c0_7 = arith.constant 0 : index
    %c0_8 = arith.constant 0 : index
    %6 = vector.load %arg4[%c0_7, %c0_8] : memref<1x4xf32, #tpu.memory_space<vmem>>, vector<1x4xf32>
    %7 = vector.broadcast %6 : vector<1x4xf32> to vector<256x4xf32>
    %8 = arith.addf %5, %7 : vector<256x4xf32>
    %9 = vector.shape_cast %8 : vector<256x4xf32> to vector<32x8x4xf32>
    %cst_9 = arith.constant dense<0xFF800000> : vector<32x4xf32>
    %10 = vector.multi_reduction <maximumf>, %9, %cst_9 [1] : vector<32x8x4xf32> to vector<32x4xf32>
    %11 = vector.shape_cast %10 : vector<32x4xf32> to vector<32x1x4xf32>
    %12 = vector.broadcast %11 : vector<32x1x4xf32> to vector<32x8x4xf32>
    %13 = arith.subf %9, %12 : vector<32x8x4xf32>
    %14 = math.exp %13 : vector<32x8x4xf32>
    %cst_10 = arith.constant dense<0.000000e+00> : vector<32x4xf32>
    %15 = vector.multi_reduction <add>, %14, %cst_10 [1] : vector<32x8x4xf32> to vector<32x4xf32>
    %16 = vector.shape_cast %15 : vector<32x4xf32> to vector<32x1x4xf32>
    %17 = tpu.reciprocal %16 {approx = true} : vector<32x1x4xf32> -> vector<32x1x4xf32>
    %18 = vector.broadcast %17 : vector<32x1x4xf32> to vector<32x8x4xf32>
    %19 = arith.mulf %14, %18 : vector<32x8x4xf32>
    %20 = vector.shape_cast %19 : vector<32x8x4xf32> to vector<256x4xf32>
    %c0_11 = arith.constant 0 : index
    %c0_12 = arith.constant 0 : index
    %21 = vector.load %arg5[%c0_11, %c0_12] : memref<4x32xf32, #tpu.memory_space<vmem>>, vector<4x32xf32>
    %cst_13 = arith.constant dense<0.000000e+00> : vector<256x32xf32>
    %22 = tpu.matmul %20, %21, %cst_13 {dimension_numbers = #tpu.dot_dimension_numbers<[1], [0], [0], [1], [0, 0, 1, 1], [], []>} : vector<256x4xf32>, vector<4x32xf32>, vector<256x32xf32> -> vector<256x32xf32>
    %23 = arith.mulf %22, %3 : vector<256x32xf32>
    %24 = vector.shape_cast %23 : vector<256x32xf32> to vector<32x8x32xf32>
    %cst_14 = arith.constant dense<0.000000e+00> : vector<32x32xf32>
    %25 = vector.multi_reduction <add>, %24, %cst_14 [1] : vector<32x8x32xf32> to vector<32x32xf32>
    %c0_15 = arith.constant 0 : index
    %c0_16 = arith.constant 0 : index
    %26 = vector.load %arg6[%c0_15, %c0_16] : memref<32x32xf32, #tpu.memory_space<vmem>>, vector<32x32xf32>
    tpu.vector_store %arg6[%c0_15, %c0_16], %25 {strides = array<i32>} : memref<32x32xf32, #tpu.memory_space<vmem>>, vector<32x32xf32>,
    return
  }
  func.func @transform_0(%arg0: i32) -> (i32, i32, i32) {
    %c0_i32 = arith.constant 0 : i32
    %c0_i32_0 = arith.constant 0 : i32
    %c0_i32_1 = arith.constant 0 : i32
    return %arg0, %c0_i32, %c0_i32_0 : i32, i32, i32
  }
  func.func @transform_1(%arg0: i32) -> (i32, i32) {
    %c0_i32 = arith.constant 0 : i32
    %c0_i32_0 = arith.constant 0 : i32
    %c0_i32_1 = arith.constant 0 : i32
    return %c0_i32, %c0_i32_0 : i32, i32
  }
  func.func @transform_2(%arg0: i32) -> (i32, i32) {
    %c0_i32 = arith.constant 0 : i32
    %c0_i32_0 = arith.constant 0 : i32
    %c0_i32_1 = arith.constant 0 : i32
    return %c0_i32, %c0_i32_0 : i32, i32
  }
  func.func @transform_3(%arg0: i32) -> (i32, i32) {
    %c0_i32 = arith.constant 0 : i32
    %c0_i32_0 = arith.constant 0 : i32
    %c0_i32_1 = arith.constant 0 : i32
    return %c0_i32, %c0_i32_0 : i32, i32
  }
  func.func @transform_4(%arg0: i32) -> (i32, i32) {
    %c0_i32 = arith.constant 0 : i32
    %c0_i32_0 = arith.constant 0 : i32
    %c0_i32_1 = arith.constant 0 : i32
    return %c0_i32, %c0_i32_0 : i32, i32
  }
  func.func @transform_5(%arg0: i32) -> (i32, i32) {
    %c0_i32 = arith.constant 0 : i32
    %c0_i32_0 = arith.constant 0 : i32
    return %arg0, %c0_i32 : i32, i32
  }
}

</mosaic_0001>

<llo_original>
// kernel: tpu_custom_call.1
$region0: #{tpu_custom_call.1}
  #allocation0 [shape = 'u32[]', space=smem, size = 0x4, offset = 0x4, fixed_abs, tag = 'smem constant byte address 0x4 - core index']
  #allocation1 [shape = 'u32[144,128]{1,0:T(1,128)}', space=vmem, size = 0x12000, scoped, tag = 'internal scratch']
  %s0 = inlined_call_operand.vmem [shape: bf16[64,8,32], index: 0, kind: input, shape index: {}]
  %s1 = inlined_call_operand.vmem [shape: bf16[32,32], index: 1, kind: input, shape index: {}]
  %s2 = inlined_call_operand.vmem [shape: bf16[32,4], index: 2, kind: input, shape index: {}]
  %s3 = inlined_call_operand.vmem [shape: f32[1,4], index: 3, kind: input, shape index: {}]
  %s4 = inlined_call_operand.vmem [shape: f32[4,32], index: 4, kind: input, shape index: {}]
  %s5 = inlined_call_operand.vmem [shape: f32[64,32], index: 5, kind: output, shape index: {}]
  %s6 = sld [smem:[#allocation0]]
  $region53: #{tpu_custom_call.1} parent=0
    _
  %s8 = ssub.s32 1, %s6
  %s9 = scalar_select 0, %s8, %s6
  loop: start=0, step=1, limit=4
  $region2: #{tpu_custom_call.1} parent=0 // loop_pre_header
    _
  $region3: #{tpu_custom_call.1} parent=0 // loop_header
    %s11 = sphi 0, %s15
    %p12 = scmp.ge.s32.totalorder %s11, 4
    %s21 = sphi 0, %s23
    %s24 = sphi 0, %s21
    %s25 = sphi 0, %s24
    %s41 = sphi 0, %s25
    %s45 = sphi 0, %s45
    %s47 = sphi 0, %s45
    %s48 = sphi 0, %s47
    %s62 = sphi 0, %s48
    %s66 = sphi 0, %s66
    %s68 = sphi 0, %s66
    %s69 = sphi 0, %s68
    %s83 = sphi 0, %s69
    %s87 = sphi 0, %s87
    %s89 = sphi 0, %s87
    %s90 = sphi 0, %s89
    %s104 = sphi 0, %s90
    %s108 = sphi 0, %s108
    %s110 = sphi 0, %s108
    %s111 = sphi 0, %s110
    %s125 = sphi 0, %s111
    %s131 = sphi 0, %s133
    %s134 = sphi 0, %s131
    %s135 = sphi 0, %s134
    %s151 = sphi 0, %s135
  $region4: #{tpu_custom_call.1} parent=0 // loop_header_branch
    %14 = sbr.rel (%p12) target = $region8
  $region5: #{tpu_custom_call.1} parent=0 // loop_body
    %s16 = ssub.s32 %s11, 1
    %s17 = ssub.s32 %s11, 2
    %s18 = sadd.s32 %s11, 1
    %s19 = ssub.s32 %s11, %s18
    %p20 = scmp.eq.s32.totalorder %s19, 0
    %s22 = sadd.s32 %s21, 1
    %s23 = scalar_select %p20, %s21, %s22
    %p26 = pneg %p20
    %p27 = scmp.eq.s32.totalorder %s11, 1
    %p28 = por %p26, %p27
    %p29 = scmp.ne.s32.totalorder %s21, %s24
    %p30 = scmp.eq.s32.totalorder %s11, 0
    %p31 = por %p29, %p30
    %p32 = scmp.ne.s32.totalorder %s21, %s24
    %p33 = scmp.eq.s32.totalorder %s16, 1
    %p34 = por %p32, %p33
    %p35 = scmp.ne.s32.totalorder %s24, %s25
    %p36 = scmp.eq.s32.totalorder %s16, 0
    %p37 = por %p35, %p36
    %p38 = scmp.ne.s32.totalorder %s24, %s25
    %p39 = scmp.eq.s32.totalorder %s17, 1
    %p40 = por %p38, %p39
    %p42 = scmp.ne.s32.totalorder %s25, %s41
    %p43 = scmp.eq.s32.totalorder %s17, 0
    %p44 = por %p42, %p43
    %s46 = sadd.s32 %s45, 1
    %p49 = scmp.eq.s32.totalorder %s11, 1
    %p50 = scmp.ne.s32.totalorder %s45, %s47
    %p51 = scmp.eq.s32.totalorder %s11, 0
    %p52 = por %p50, %p51
    %p53 = scmp.ne.s32.totalorder %s45, %s47
    %p54 = scmp.eq.s32.totalorder %s16, 1
    %p55 = por %p53, %p54
    %p56 = scmp.ne.s32.totalorder %s47, %s48
    %p57 = scmp.eq.s32.totalorder %s16, 0
    %p58 = por %p56, %p57
    %p59 = scmp.ne.s32.totalorder %s47, %s48
    %p60 = scmp.eq.s32.totalorder %s17, 1
    %p61 = por %p59, %p60
    %p63 = scmp.ne.s32.totalorder %s48, %s62
    %p64 = scmp.eq.s32.totalorder %s17, 0
    %p65 = por %p63, %p64
    %s67 = sadd.s32 %s66, 1
    %p70 = scmp.eq.s32.totalorder %s11, 1
    %p71 = scmp.ne.s32.totalorder %s66, %s68
    %p72 = scmp.eq.s32.totalorder %s11, 0
    %p73 = por %p71, %p72
    %p74 = scmp.ne.s32.totalorder %s66, %s68
    %p75 = scmp.eq.s32.totalorder %s16, 1
    %p76 = por %p74, %p75
    %p77 = scmp.ne.s32.totalorder %s68, %s69
    %p78 = scmp.eq.s32.totalorder %s16, 0
    %p79 = por %p77, %p78
    %p80 = scmp.ne.s32.totalorder %s68, %s69
    %p81 = scmp.eq.s32.totalorder %s17, 1
    %p82 = por %p80, %p81
    %p84 = scmp.ne.s32.totalorder %s69, %s83
    %p85 = scmp.eq.s32.totalorder %s17, 0
    %p86 = por %p84, %p85
    %s88 = sadd.s32 %s87, 1
    %p91 = scmp.eq.s32.totalorder %s11, 1
    %p92 = scmp.ne.s32.totalorder %s87, %s89
    %p93 = scmp.eq.s32.totalorder %s11, 0
    %p94 = por %p92, %p93
    %p95 = scmp.ne.s32.totalorder %s87, %s89
    %p96 = scmp.eq.s32.totalorder %s16, 1
    %p97 = por %p95, %p96
    %p98 = scmp.ne.s32.totalorder %s89, %s90
    %p99 = scmp.eq.s32.totalorder %s16, 0
    %p100 = por %p98, %p99
    %p101 = scmp.ne.s32.totalorder %s89, %s90
    %p102 = scmp.eq.s32.totalorder %s17, 1
    %p103 = por %p101, %p102
    %p105 = scmp.ne.s32.totalorder %s90, %s104
    %p106 = scmp.eq.s32.totalorder %s17, 0
    %p107 = por %p105, %p106
    %s109 = sadd.s32 %s108, 1
    %p112 = scmp.eq.s32.totalorder %s11, 1
    %p113 = scmp.ne.s32.totalorder %s108, %s110
    %p114 = scmp.eq.s32.totalorder %s11, 0
    %p115 = por %p113, %p114
    %p116 = scmp.ne.s32.totalorder %s108, %s110
    %p117 = scmp.eq.s32.totalorder %s16, 1
    %p118 = por %p116, %p117
    %p119 = scmp.ne.s32.totalorder %s110, %s111
    %p120 = scmp.eq.s32.totalorder %s16, 0
    %p121 = por %p119, %p120
    %p122 = scmp.ne.s32.totalorder %s110, %s111
    %p123 = scmp.eq.s32.totalorder %s17, 1
    %p124 = por %p122, %p123
    %p126 = scmp.ne.s32.totalorder %s111, %s125
    %p127 = scmp.eq.s32.totalorder %s17, 0
    %p128 = por %p126, %p127
    %s129 = ssub.s32 %s11, %s18
    %p130 = scmp.eq.s32.totalorder %s129, 0
    %s132 = sadd.s32 %s131, 1
    %s133 = scalar_select %p130, %s131, %s132
    %p136 = pneg %p130
    %p137 = scmp.eq.s32.totalorder %s11, 1
    %p138 = por %p136, %p137
    %p139 = scmp.ne.s32.totalorder %s131, %s134
    %p140 = scmp.eq.s32.totalorder %s11, 0
    %p141 = por %p139, %p140
    %p142 = scmp.ne.s32.totalorder %s131, %s134
    %p143 = scmp.eq.s32.totalorder %s16, 1
    %p144 = por %p142, %p143
    %p145 = scmp.ne.s32.totalorder %s134, %s135
    %p146 = scmp.eq.s32.totalorder %s16, 0
    %p147 = por %p145, %p146
    %p148 = scmp.ne.s32.totalorder %s134, %s135
    %p149 = scmp.eq.s32.totalorder %s17, 1
    %p150 = por %p148, %p149
    %p152 = scmp.ne.s32.totalorder %s135, %s151
    %p153 = scmp.eq.s32.totalorder %s17, 0
    %p154 = por %p152, %p153
    %p155 = scmp.le.s32.totalorder 1, %s11
    %p156 = scmp.lt.s32.totalorder %s11, 3
    %p157 = pnand %p155, %p156
    %p158 = pneg %p157
    // Predicated region
    $region9: #{tpu_custom_call.1} parent=5 // pred_check
      _
    $region10: #{tpu_custom_call.1} parent=5 // pred_check_branch
      %160 = sbr.rel (%p157) target = $region12
    $region11: #{tpu_custom_call.1} parent=5 // pred_region
      %s161 = ssub.s32 %s11, 1
      // Predicated region
      $region13: #{tpu_custom_call.1} parent=11 // pred_check
        %p162 = pneg %p58
      $region14: #{tpu_custom_call.1} parent=11 // pred_check_branch
        %164 = sbr.rel (%p162) target = $region16
      $region15: #{tpu_custom_call.1} parent=11 // pred_region
        _
      $region16: #{tpu_custom_call.1} parent=11 // pred_fallthru
        _
      // Predicated region
      $region17: #{tpu_custom_call.1} parent=11 // pred_check
        %p165 = pneg %p79
      $region18: #{tpu_custom_call.1} parent=11 // pred_check_branch
        %167 = sbr.rel (%p165) target = $region20
      $region19: #{tpu_custom_call.1} parent=11 // pred_region
        _
      $region20: #{tpu_custom_call.1} parent=11 // pred_fallthru
        _
      // Predicated region
      $region21: #{tpu_custom_call.1} parent=11 // pred_check
        %p168 = pneg %p100
      $region22: #{tpu_custom_call.1} parent=11 // pred_check_branch
        %170 = sbr.rel (%p168) target = $region24
      $region23: #{tpu_custom_call.1} parent=11 // pred_region
        _
      $region24: #{tpu_custom_call.1} parent=11 // pred_fallthru
        _
      // Predicated region
      $region25: #{tpu_custom_call.1} parent=11 // pred_check
        %p171 = pneg %p121
      $region26: #{tpu_custom_call.1} parent=11 // pred_check_branch
        %173 = sbr.rel (%p171) target = $region28
      $region27: #{tpu_custom_call.1} parent=11 // pred_region
        _
      $region28: #{tpu_custom_call.1} parent=11 // pred_fallthru
        _
    $region12: #{tpu_custom_call.1} parent=5 // pred_fallthru
      _
    %p174 = scmp.lt.s32.totalorder %s11, 2
    // Predicated region
    $region29: #{tpu_custom_call.1} parent=5 // pred_check
      %p175 = pneg %p174
    $region30: #{tpu_custom_call.1} parent=5 // pred_check_branch
      %177 = sbr.rel (%p175) target = $region32
    $region31: #{tpu_custom_call.1} parent=5 // pred_region
      // Predicated region
      $region33: #{tpu_custom_call.1} parent=31 // pred_check
        %p178 = pneg %p31
      $region34: #{tpu_custom_call.1} parent=31 // pred_check_branch
        %180 = sbr.rel (%p178) target = $region36
      $region35: #{tpu_custom_call.1} parent=31 // pred_region
        %s181 = smul.u32 32, %s11
        %p182 = scmp.lt.s32.totalorder %s181, 63
        %s183 = scalar_select %p182, %s181, 63
        %s184 = smul.addr %s183, 4
        %s185 = scalar_lea.vmem %s0, %s184
        %s186 = smul.u32 32, %s11
      $region36: #{tpu_custom_call.1} parent=31 // pred_fallthru
        _
    $region32: #{tpu_custom_call.1} parent=5 // pred_fallthru
      _
    %p187 = scmp.le.s32.totalorder 1, %s11
    %p188 = scmp.lt.s32.totalorder %s11, 3
    %p189 = pnand %p187, %p188
    %p190 = pneg %p189
    // Predicated region
    $region37: #{tpu_custom_call.1} parent=5 // pred_check
      _
    $region38: #{tpu_custom_call.1} parent=5 // pred_check_branch
      %192 = sbr.rel (%p189) target = $region40
    $region39: #{tpu_custom_call.1} parent=5 // pred_region
      %s193 = ssub.s32 %s11, 1
      %s194 = smul.u32 32, %s16
      %p195 = scmp.lt.s32.totalorder %s194, 63
      %s196 = scalar_select %p195, %s194, 63
      %s197 = smul.addr %s196, 4
      %s198 = scalar_lea.vmem %s0, %s197
      %p199 = pneg %p37
      %p200 = pneg %p34
      %p201 = pneg %p58
      %p202 = pneg %p55
      %p203 = pneg %p79
      %p204 = pneg %p76
      %p205 = pneg %p100
      %p206 = pneg %p97
      %p207 = pneg %p121
      %p208 = pneg %p118
      %p209 = pneg %p147
      %p210 = pneg %p144
      %s211 = smul.u32 4, %s16
      %p212 = scmp.lt.s32.totalorder %s211, 7
      %s213 = scalar_select %p212, %s211, 7
      %s214 = smul.addr %s213, 8
      %s215 = scalar_lea.vmem %s5, %s214
      %s216 = smul.u32 32, %s16
      %p217 = scmp.lt.s32.totalorder %s216, 63
      %s218 = scalar_select %p217, %s216, 63
      %s219 = smul.addr %s218, 4
      %s220 = scalar_lea.vmem %s0, %s219
      %s221 = smul.u32 32, %s16
      %s222 = smul.u32 4, %s16
      %p223 = scmp.lt.s32.totalorder %s222, 7
      %s224 = scalar_select %p223, %s222, 7
      %s225 = smul.addr %s224, 8
      %s226 = scalar_lea.vmem %s5, %s225
      %s227 = smul.u32 4, %s16
      %v229 = vld [vmem:[%s220] sm:$0xf]
      %v230 = vld [vmem:[%s220 + $0x4] sm:$0xf]
      %v231 = vld [vmem:[%s220 + $0x8] sm:$0xf]
      %v232 = vld [vmem:[%s220 + $0xc] sm:$0xf]
      %v233 = vld [vmem:[%s220 + $0x10] sm:$0xf]
      %v234 = vld [vmem:[%s220 + $0x14] sm:$0xf]
      %v235 = vld [vmem:[%s220 + $0x18] sm:$0xf]
      %v236 = vld [vmem:[%s220 + $0x1c] sm:$0xf]
      %v237 = vld [vmem:[%s220 + $0x20] sm:$0xf]
      %v238 = vld [vmem:[%s220 + $0x24] sm:$0xf]
      %v239 = vld [vmem:[%s220 + $0x28] sm:$0xf]
      %v240 = vld [vmem:[%s220 + $0x2c] sm:$0xf]
      %v241 = vld [vmem:[%s220 + $0x30] sm:$0xf]
      %v242 = vld [vmem:[%s220 + $0x34] sm:$0xf]
      %v243 = vld [vmem:[%s220 + $0x38] sm:$0xf]
      %v244 = vld [vmem:[%s220 + $0x3c] sm:$0xf]
      %v245 = vld [vmem:[%s220 + $0x40] sm:$0xf]
      %v246 = vld [vmem:[%s220 + $0x44] sm:$0xf]
      %v247 = vld [vmem:[%s220 + $0x48] sm:$0xf]
      %v248 = vld [vmem:[%s220 + $0x4c] sm:$0xf]
      %v249 = vld [vmem:[%s220 + $0x50] sm:$0xf]
      %v250 = vld [vmem:[%s220 + $0x54] sm:$0xf]
      %v251 = vld [vmem:[%s220 + $0x58] sm:$0xf]
      %v252 = vld [vmem:[%s220 + $0x5c] sm:$0xf]
      %v253 = vld [vmem:[%s220 + $0x60] sm:$0xf]
      %v254 = vld [vmem:[%s220 + $0x64] sm:$0xf]
      %v255 = vld [vmem:[%s220 + $0x68] sm:$0xf]
      %v256 = vld [vmem:[%s220 + $0x6c] sm:$0xf]
      %v257 = vld [vmem:[%s220 + $0x70] sm:$0xf]
      %v258 = vld [vmem:[%s220 + $0x74] sm:$0xf]
      %v259 = vld [vmem:[%s220 + $0x78] sm:$0xf]
      %v260 = vld [vmem:[%s220 + $0x7c] sm:$0xf]
      %v261 = vld [vmem:[%s1] sm:$0xf]
      %v262 = vld [vmem:[%s1 + $0x4] sm:$0xf]
      %v263 = vld [vmem:[%s1 + $0x8] sm:$0xf]
      %v264 = vld [vmem:[%s1 + $0xc] sm:$0xf]
      %v297 = vunpack.c.l.b16 %v229
      %v298 = vunpack.c.l.b16 %v230
      %v299 = vunpack.c.l.b16 %v231
      %v300 = vunpack.c.l.b16 %v232
      %v301 = vunpack.c.l.b16 %v233
      %v302 = vunpack.c.l.b16 %v234
      %v303 = vunpack.c.l.b16 %v235
      %v304 = vunpack.c.l.b16 %v236
      %v305 = vunpack.c.l.b16 %v237
      %v306 = vunpack.c.l.b16 %v238
      %v307 = vunpack.c.l.b16 %v239
      %v308 = vunpack.c.l.b16 %v240
      %v309 = vunpack.c.l.b16 %v241
      %v310 = vunpack.c.l.b16 %v242
      %v311 = vunpack.c.l.b16 %v243
      %v312 = vunpack.c.l.b16 %v244
      %v313 = vunpack.c.l.b16 %v245
      %v314 = vunpack.c.l.b16 %v246
      %v315 = vunpack.c.l.b16 %v247
      %v316 = vunpack.c.l.b16 %v248
      %v317 = vunpack.c.l.b16 %v249
      %v318 = vunpack.c.l.b16 %v250
      %v319 = vunpack.c.l.b16 %v251
      %v320 = vunpack.c.l.b16 %v252
      %v321 = vunpack.c.l.b16 %v253
      %v322 = vunpack.c.l.b16 %v254
      %v323 = vunpack.c.l.b16 %v255
      %v324 = vunpack.c.l.b16 %v256
      %v325 = vunpack.c.l.b16 %v257
      %v326 = vunpack.c.l.b16 %v258
      %v327 = vunpack.c.l.b16 %v259
      %v328 = vunpack.c.l.b16 %v260
      %v329 = vpack.c.b16 %v298, %v297
      %v330 = vpack.c.b16 %v300, %v299
      %v331 = vpack.c.b16 %v302, %v301
      %v332 = vpack.c.b16 %v304, %v303
      %v333 = vpack.c.b16 %v306, %v305
      %v334 = vpack.c.b16 %v308, %v307
      %v335 = vpack.c.b16 %v310, %v309
      %v336 = vpack.c.b16 %v312, %v311
      %v337 = vpack.c.b16 %v314, %v313
      %v338 = vpack.c.b16 %v316, %v315
      %v339 = vpack.c.b16 %v318, %v317
      %v340 = vpack.c.b16 %v320, %v319
      %v341 = vpack.c.b16 %v322, %v321
      %v342 = vpack.c.b16 %v324, %v323
      %v343 = vpack.c.b16 %v326, %v325
      %v344 = vpack.c.b16 %v328, %v327
      %v349 = vunpack.c.l.b16 %v261
      %v350 = vunpack.c.l.b16 %v262
      %v351 = vunpack.c.l.b16 %v263
      %v352 = vunpack.c.l.b16 %v264
      %v353 = vpack.c.b16 %v350, %v349
      %v354 = vpack.c.b16 %v352, %v351
      %vm357 = vcmask 261120
      %v359 = vsel %vm357, %v329, 0
      %v362 = vsel %vm357, %v330, 0
      %v365 = vsel %vm357, %v331, 0
      %v368 = vsel %vm357, %v332, 0
      %v371 = vsel %vm357, %v333, 0
      %v374 = vsel %vm357, %v334, 0
      %v377 = vsel %vm357, %v335, 0
      %v380 = vsel %vm357, %v336, 0
      %v383 = vsel %vm357, %v337, 0
      %v386 = vsel %vm357, %v338, 0
      %v389 = vsel %vm357, %v339, 0
      %v392 = vsel %vm357, %v340, 0
      %v395 = vsel %vm357, %v341, 0
      %v398 = vsel %vm357, %v342, 0
      %v401 = vsel %vm357, %v343, 0
      %v404 = vsel %vm357, %v344, 0
      %406 = vmatprep.subr.bf16.mxu0 0
      %407 = vmatpush1.bf16.msra.mxu0 0
      %408 = vmatprep.subr.bf16.mxu0 0
      %409 = vmatpush1.bf16.msra.mxu0 0
      %410 = vmatprep.subr.bf16.mxu0 0
      %411 = vmatpush1.bf16.msra.mxu0 0
      %412 = vmatprep.subr.bf16.mxu0 0
      %413 = vmatpush1.bf16.msra.mxu0 0
      %414 = vmatprep.subr.bf16.mxu0 0
      %415 = vmatpush1.bf16.msra.mxu0 0
      %416 = vmatprep.subr.bf16.mxu0 0
      %417 = vmatpush1.bf16.msra.mxu0 0
      %418 = vmatprep.subr.bf16.mxu0 0
      %419 = vmatpush1.bf16.msra.mxu0 %v354
      %420 = vmatprep.subr.bf16.mxu0 0
      %421 = vmatpush1.bf16.msra.mxu0 %v353
      %422 = vmatprep.subr.bf16.mxu0 0
      %423 = vmatpush2.bf16.msra.mxu0 0
      %424 = vmatprep.subr.bf16.mxu0 0
      %425 = vmatpush2.bf16.msra.mxu0 0
      %426 = vmatprep.subr.bf16.mxu0 0
      %427 = vmatpush2.bf16.msra.mxu0 0
      %428 = vmatprep.subr.bf16.mxu0 0
      %429 = vmatpush2.bf16.msra.mxu0 0
      %430 = vmatprep.subr.bf16.mxu0 0
      %431 = vmatpush2.bf16.msra.mxu0 0
      %432 = vmatprep.subr.bf16.mxu0 0
      %433 = vmatpush2.bf16.msra.mxu0 0
      %434 = vmatprep.subr.bf16.mxu0 0
      %435 = vmatpush2.bf16.msra.mxu0 0
      %436 = vmatprep.subr.bf16.mxu0 0
      %437 = vmatpush2.bf16.msra.mxu0 0
      %438 = vmatprep.mubr.bf16.mxu0 0
      %439 = vmatmul.mubr.bf16.gmra.mxu0 %v359
      %v440 = vpop.f32.mrf.mxu0
      %v441 = vadd.f32 0.0, %v440
      %v442 = vpop.f32.mrf.mxu0
      %v443 = vpop.f32.mrf.mxu0
      %v444 = vadd.f32 0.0, %v443
      %v445 = vpop.f32.mrf.mxu0
      %446 = vmatprep.mubr.bf16.mxu0 0
      %447 = vmatmul.mubr.bf16.gmra.mxu0 %v362
      %v448 = vpop.f32.mrf.mxu0
      %v449 = vadd.f32 0.0, %v448
      %v450 = vpop.f32.mrf.mxu0
      %v451 = vpop.f32.mrf.mxu0
      %v452 = vadd.f32 0.0, %v451
      %v453 = vpop.f32.mrf.mxu0
      %454 = vmatprep.mubr.bf16.mxu0 0
      %455 = vmatmul.mubr.bf16.gmra.mxu0 %v365
      %v456 = vpop.f32.mrf.mxu0
      %v457 = vadd.f32 0.0, %v456
      %v458 = vpop.f32.mrf.mxu0
      %v459 = vpop.f32.mrf.mxu0
      %v460 = vadd.f32 0.0, %v459
      %v461 = vpop.f32.mrf.mxu0
      %462 = vmatprep.mubr.bf16.mxu0 0
      %463 = vmatmul.mubr.bf16.gmra.mxu0 %v368
      %v464 = vpop.f32.mrf.mxu0
      %v465 = vadd.f32 0.0, %v464
      %v466 = vpop.f32.mrf.mxu0
      %v467 = vpop.f32.mrf.mxu0
      %v468 = vadd.f32 0.0, %v467
      %v469 = vpop.f32.mrf.mxu0
      %470 = vmatprep.mubr.bf16.mxu0 0
      %471 = vmatmul.mubr.bf16.gmra.mxu0 %v371
      %v472 = vpop.f32.mrf.mxu0
      %v473 = vadd.f32 0.0, %v472
      %v474 = vpop.f32.mrf.mxu0
      %v475 = vpop.f32.mrf.mxu0
      %v476 = vadd.f32 0.0, %v475
      %v477 = vpop.f32.mrf.mxu0
      %478 = vmatprep.mubr.bf16.mxu0 0
      %479 = vmatmul.mubr.bf16.gmra.mxu0 %v374
      %v480 = vpop.f32.mrf.mxu0
      %v481 = vadd.f32 0.0, %v480
      %v482 = vpop.f32.mrf.mxu0
      %v483 = vpop.f32.mrf.mxu0
      %v484 = vadd.f32 0.0, %v483
      %v485 = vpop.f32.mrf.mxu0
      %486 = vmatprep.mubr.bf16.mxu0 0
      %487 = vmatmul.mubr.bf16.gmra.mxu0 %v377
      %v488 = vpop.f32.mrf.mxu0
      %v489 = vadd.f32 0.0, %v488
      %v490 = vpop.f32.mrf.mxu0
      %v491 = vpop.f32.mrf.mxu0
      %v492 = vadd.f32 0.0, %v491
      %v493 = vpop.f32.mrf.mxu0
      %494 = vmatprep.mubr.bf16.mxu0 0
      %495 = vmatmul.mubr.bf16.gmra.mxu0 %v380
      %v496 = vpop.f32.mrf.mxu0
      %v497 = vadd.f32 0.0, %v496
      %v498 = vpop.f32.mrf.mxu0
      %v499 = vpop.f32.mrf.mxu0
      %v500 = vadd.f32 0.0, %v499
      %v501 = vpop.f32.mrf.mxu0
      %502 = vmatprep.mubr.bf16.mxu0 0
      %503 = vmatmul.mubr.bf16.gmra.mxu0 %v383
      %v504 = vpop.f32.mrf.mxu0
      %v505 = vadd.f32 0.0, %v504
      %v506 = vpop.f32.mrf.mxu0
      %v507 = vpop.f32.mrf.mxu0
      %v508 = vadd.f32 0.0, %v507
      %v509 = vpop.f32.mrf.mxu0
      %510 = vmatprep.mubr.bf16.mxu0 0
      %511 = vmatmul.mubr.bf16.gmra.mxu0 %v386
      %v512 = vpop.f32.mrf.mxu0
      %v513 = vadd.f32 0.0, %v512
      %v514 = vpop.f32.mrf.mxu0
      %v515 = vpop.f32.mrf.mxu0
      %v516 = vadd.f32 0.0, %v515
      %v517 = vpop.f32.mrf.mxu0
      %518 = vmatprep.mubr.bf16.mxu0 0
      %519 = vmatmul.mubr.bf16.gmra.mxu0 %v389
      %v520 = vpop.f32.mrf.mxu0
      %v521 = vadd.f32 0.0, %v520
      %v522 = vpop.f32.mrf.mxu0
      %v523 = vpop.f32.mrf.mxu0
      %v524 = vadd.f32 0.0, %v523
      %v525 = vpop.f32.mrf.mxu0
      %526 = vmatprep.mubr.bf16.mxu0 0
      %527 = vmatmul.mubr.bf16.gmra.mxu0 %v392
      %v528 = vpop.f32.mrf.mxu0
      %v529 = vadd.f32 0.0, %v528
      %v530 = vpop.f32.mrf.mxu0
      %v531 = vpop.f32.mrf.mxu0
      %v532 = vadd.f32 0.0, %v531
      %v533 = vpop.f32.mrf.mxu0
      %534 = vmatprep.mubr.bf16.mxu0 0
      %535 = vmatmul.mubr.bf16.gmra.mxu0 %v395
      %v536 = vpop.f32.mrf.mxu0
      %v537 = vadd.f32 0.0, %v536
      %v538 = vpop.f32.mrf.mxu0
      %v539 = vpop.f32.mrf.mxu0
      %v540 = vadd.f32 0.0, %v539
      %v541 = vpop.f32.mrf.mxu0
      %542 = vmatprep.mubr.bf16.mxu0 0
      %543 = vmatmul.mubr.bf16.gmra.mxu0 %v398
      %v544 = vpop.f32.mrf.mxu0
      %v545 = vadd.f32 0.0, %v544
      %v546 = vpop.f32.mrf.mxu0
      %v547 = vpop.f32.mrf.mxu0
      %v548 = vadd.f32 0.0, %v547
      %v549 = vpop.f32.mrf.mxu0
      %550 = vmatprep.mubr.bf16.mxu0 0
      %551 = vmatmul.mubr.bf16.gmra.mxu0 %v401
      %v552 = vpop.f32.mrf.mxu0
      %v553 = vadd.f32 0.0, %v552
      %v554 = vpop.f32.mrf.mxu0
      %v555 = vpop.f32.mrf.mxu0
      %v556 = vadd.f32 0.0, %v555
      %v557 = vpop.f32.mrf.mxu0
      %558 = vmatprep.mubr.bf16.mxu0 0
      %559 = vmatmul.mubr.bf16.gmra.mxu0 %v404
      %v560 = vpop.f32.mrf.mxu0
      %v561 = vadd.f32 0.0, %v560
      %v562 = vpop.f32.mrf.mxu0
      %v563 = vpop.f32.mrf.mxu0
      %v564 = vadd.f32 0.0, %v563
      %v565 = vpop.f32.mrf.mxu0
      %566 = vdwg.mxu0
      %v567 = vld [vmem:[%s2] sm:$0xf]
      %v568 = vld [vmem:[%s2 + $0x4] sm:$0xf]
      %v569 = vld [vmem:[%s2 + $0x8] sm:$0xf]
      %v570 = vld [vmem:[%s2 + $0xc] sm:$0xf]
      %v571 = vld [vmem:[%s3] sm:$0x1]
      %v573 = vlaneseq
      %v574 = vshrl.u32 %v573, 7
      %v575 = vsub.s32 0, %v574
      %v576 = vrot.slane %v571, %v575
      %v582 = vunpack.c.l.b16 %v567
      %v583 = vunpack.c.l.b16 %v568
      %v584 = vunpack.c.l.b16 %v569
      %v585 = vunpack.c.l.b16 %v570
      %v586 = vpack.c.b16 %v583, %v582
      %v587 = vpack.c.b16 %v585, %v584
      %590 = vmatprep.subr.bf16.mxu0 0
      %591 = vmatpush1.bf16.msra.mxu0 0
      %592 = vmatprep.subr.bf16.mxu0 0
      %593 = vmatpush1.bf16.msra.mxu0 0
      %594 = vmatprep.subr.bf16.mxu0 0
      %595 = vmatpush1.bf16.msra.mxu0 0
      %596 = vmatprep.subr.bf16.mxu0 0
      %597 = vmatpush1.bf16.msra.mxu0 0
      %598 = vmatprep.subr.bf16.mxu0 0
      %599 = vmatpush1.bf16.msra.mxu0 0
      %600 = vmatprep.subr.bf16.mxu0 0
      %601 = vmatpush1.bf16.msra.mxu0 0
      %602 = vmatprep.subr.bf16.mxu0 0
      %603 = vmatpush1.bf16.msra.mxu0 %v587
      %604 = vmatprep.subr.bf16.mxu0 0
      %605 = vmatpush1.bf16.msra.mxu0 %v586
      %606 = vmatprep.subr.bf16.mxu0 0
      %607 = vmatpush2.bf16.msra.mxu0 0
      %608 = vmatprep.subr.bf16.mxu0 0
      %609 = vmatpush2.bf16.msra.mxu0 0
      %610 = vmatprep.subr.bf16.mxu0 0
      %611 = vmatpush2.bf16.msra.mxu0 0
      %612 = vmatprep.subr.bf16.mxu0 0
      %613 = vmatpush2.bf16.msra.mxu0 0
      %614 = vmatprep.subr.bf16.mxu0 0
      %615 = vmatpush2.bf16.msra.mxu0 0
      %616 = vmatprep.subr.bf16.mxu0 0
      %617 = vmatpush2.bf16.msra.mxu0 0
      %618 = vmatprep.subr.bf16.mxu0 0
      %619 = vmatpush2.bf16.msra.mxu0 0
      %620 = vmatprep.subr.bf16.mxu0 0
      %621 = vmatpush2.bf16.msra.mxu0 0
      %622 = vmatprep.mubr.bf16.mxu0 0
      %623 = vmatmul.mubr.bf16.gmra.mxu0 %v359
      %v624 = vpop.f32.mrf.mxu0
      %v625 = vadd.f32 %v576, %v624
      %v626 = vpop.f32.mrf.mxu0
      %v627 = vpop.f32.mrf.mxu0
      %v628 = vadd.f32 %v576, %v627
      %v629 = vpop.f32.mrf.mxu0
      %630 = vmatprep.mubr.bf16.mxu0 0
      %631 = vmatmul.mubr.bf16.gmra.mxu0 %v362
      %v632 = vpop.f32.mrf.mxu0
      %v633 = vadd.f32 %v576, %v632
      %v634 = vpop.f32.mrf.mxu0
      %v635 = vpop.f32.mrf.mxu0
      %v636 = vadd.f32 %v576, %v635
      %v637 = vpop.f32.mrf.mxu0
      %638 = vmatprep.mubr.bf16.mxu0 0
      %639 = vmatmul.mubr.bf16.gmra.mxu0 %v365
      %v640 = vpop.f32.mrf.mxu0
      %v641 = vadd.f32 %v576, %v640
      %v642 = vpop.f32.mrf.mxu0
      %v643 = vpop.f32.mrf.mxu0
      %v644 = vadd.f32 %v576, %v643
      %v645 = vpop.f32.mrf.mxu0
      %646 = vmatprep.mubr.bf16.mxu0 0
      %647 = vmatmul.mubr.bf16.gmra.mxu0 %v368
      %v648 = vpop.f32.mrf.mxu0
      %v649 = vadd.f32 %v576, %v648
      %v650 = vpop.f32.mrf.mxu0
      %v651 = vpop.f32.mrf.mxu0
      %v652 = vadd.f32 %v576, %v651
      %v653 = vpop.f32.mrf.mxu0
      %654 = vmatprep.mubr.bf16.mxu0 0
      %655 = vmatmul.mubr.bf16.gmra.mxu0 %v371
      %v656 = vpop.f32.mrf.mxu0
      %v657 = vadd.f32 %v576, %v656
      %v658 = vpop.f32.mrf.mxu0
      %v659 = vpop.f32.mrf.mxu0
      %v660 = vadd.f32 %v576, %v659
      %v661 = vpop.f32.mrf.mxu0
      %662 = vmatprep.mubr.bf16.mxu0 0
      %663 = vmatmul.mubr.bf16.gmra.mxu0 %v374
      %v664 = vpop.f32.mrf.mxu0
      %v665 = vadd.f32 %v576, %v664
      %v666 = vpop.f32.mrf.mxu0
      %v667 = vpop.f32.mrf.mxu0
      %v668 = vadd.f32 %v576, %v667
      %v669 = vpop.f32.mrf.mxu0
      %670 = vmatprep.mubr.bf16.mxu0 0
      %671 = vmatmul.mubr.bf16.gmra.mxu0 %v377
      %v672 = vpop.f32.mrf.mxu0
      %v673 = vadd.f32 %v576, %v672
      %v674 = vpop.f32.mrf.mxu0
      %v675 = vpop.f32.mrf.mxu0
      %v676 = vadd.f32 %v576, %v675
      %v677 = vpop.f32.mrf.mxu0
      %678 = vmatprep.mubr.bf16.mxu0 0
      %679 = vmatmul.mubr.bf16.gmra.mxu0 %v380
      %v680 = vpop.f32.mrf.mxu0
      %v681 = vadd.f32 %v576, %v680
      %v682 = vpop.f32.mrf.mxu0
      %v683 = vpop.f32.mrf.mxu0
      %v684 = vadd.f32 %v576, %v683
      %v685 = vpop.f32.mrf.mxu0
      %686 = vmatprep.mubr.bf16.mxu0 0
      %687 = vmatmul.mubr.bf16.gmra.mxu0 %v383
      %v688 = vpop.f32.mrf.mxu0
      %v689 = vadd.f32 %v576, %v688
      %v690 = vpop.f32.mrf.mxu0
      %v691 = vpop.f32.mrf.mxu0
      %v692 = vadd.f32 %v576, %v691
      %v693 = vpop.f32.mrf.mxu0
      %694 = vmatprep.mubr.bf16.mxu0 0
      %695 = vmatmul.mubr.bf16.gmra.mxu0 %v386
      %v696 = vpop.f32.mrf.mxu0
      %v697 = vadd.f32 %v576, %v696
      %v698 = vpop.f32.mrf.mxu0
      %v699 = vpop.f32.mrf.mxu0
      %v700 = vadd.f32 %v576, %v699
      %v701 = vpop.f32.mrf.mxu0
      %702 = vmatprep.mubr.bf16.mxu0 0
      %703 = vmatmul.mubr.bf16.gmra.mxu0 %v389
      %v704 = vpop.f32.mrf.mxu0
      %v705 = vadd.f32 %v576, %v704
      %v706 = vpop.f32.mrf.mxu0
      %v707 = vpop.f32.mrf.mxu0
      %v708 = vadd.f32 %v576, %v707
      %v709 = vpop.f32.mrf.mxu0
      %710 = vmatprep.mubr.bf16.mxu0 0
      %711 = vmatmul.mubr.bf16.gmra.mxu0 %v392
      %v712 = vpop.f32.mrf.mxu0
      %v713 = vadd.f32 %v576, %v712
      %v714 = vpop.f32.mrf.mxu0
      %v715 = vpop.f32.mrf.mxu0
      %v716 = vadd.f32 %v576, %v715
      %v717 = vpop.f32.mrf.mxu0
      %718 = vmatprep.mubr.bf16.mxu0 0
      %719 = vmatmul.mubr.bf16.gmra.mxu0 %v395
      %v720 = vpop.f32.mrf.mxu0
      %v721 = vadd.f32 %v576, %v720
      %v722 = vpop.f32.mrf.mxu0
      %v723 = vpop.f32.mrf.mxu0
      %v724 = vadd.f32 %v576, %v723
      %v725 = vpop.f32.mrf.mxu0
      %726 = vmatprep.mubr.bf16.mxu0 0
      %727 = vmatmul.mubr.bf16.gmra.mxu0 %v398
      %v728 = vpop.f32.mrf.mxu0
      %v729 = vadd.f32 %v576, %v728
      %v730 = vpop.f32.mrf.mxu0
      %v731 = vpop.f32.mrf.mxu0
      %v732 = vadd.f32 %v576, %v731
      %v733 = vpop.f32.mrf.mxu0
      %734 = vmatprep.mubr.bf16.mxu0 0
      %735 = vmatmul.mubr.bf16.gmra.mxu0 %v401
      %v736 = vpop.f32.mrf.mxu0
      %v737 = vadd.f32 %v576, %v736
      %v738 = vpop.f32.mrf.mxu0
      %v739 = vpop.f32.mrf.mxu0
      %v740 = vadd.f32 %v576, %v739
      %v741 = vpop.f32.mrf.mxu0
      %742 = vmatprep.mubr.bf16.mxu0 0
      %743 = vmatmul.mubr.bf16.gmra.mxu0 %v404
      %v744 = vpop.f32.mrf.mxu0
      %v745 = vadd.f32 %v576, %v744
      %v746 = vpop.f32.mrf.mxu0
      %v747 = vpop.f32.mrf.mxu0
      %v748 = vadd.f32 %v576, %v747
      %v749 = vpop.f32.mrf.mxu0
      %750 = vdwg.mxu0
      %vm751 = vcmask 31744
      %v752 = vsel %vm751, %v625, -inf
      %v753 = vrot.slane %v752, 4
      %v754 = vmax.f32 %v752, %v753
      %v755 = vrot.slane %v754, 2
      %v756 = vmax.f32 %v754, %v755
      %v757 = vrot.slane %v756, 1
      %v758 = vmax.f32 %v756, %v757
      %v759 = vsel %vm751, %v628, -inf
      %v760 = vrot.slane %v759, 4
      %v761 = vmax.f32 %v759, %v760
      %v762 = vrot.slane %v761, 2
      %v763 = vmax.f32 %v761, %v762
      %v764 = vrot.slane %v763, 1
      %v765 = vmax.f32 %v763, %v764
      %v766 = vsel %vm751, %v633, -inf
      %v767 = vrot.slane %v766, 4
      %v768 = vmax.f32 %v766, %v767
      %v769 = vrot.slane %v768, 2
      %v770 = vmax.f32 %v768, %v769
      %v771 = vrot.slane %v770, 1
      %v772 = vmax.f32 %v770, %v771
      %v773 = vsel %vm751, %v636, -inf
      %v774 = vrot.slane %v773, 4
      %v775 = vmax.f32 %v773, %v774
      %v776 = vrot.slane %v775, 2
      %v777 = vmax.f32 %v775, %v776
      %v778 = vrot.slane %v777, 1
      %v779 = vmax.f32 %v777, %v778
      %v780 = vsel %vm751, %v641, -inf
      %v781 = vrot.slane %v780, 4
      %v782 = vmax.f32 %v780, %v781
      %v783 = vrot.slane %v782, 2
      %v784 = vmax.f32 %v782, %v783
      %v785 = vrot.slane %v784, 1
      %v786 = vmax.f32 %v784, %v785
      %v787 = vsel %vm751, %v644, -inf
      %v788 = vrot.slane %v787, 4
      %v789 = vmax.f32 %v787, %v788
      %v790 = vrot.slane %v789, 2
      %v791 = vmax.f32 %v789, %v790
      %v792 = vrot.slane %v791, 1
      %v793 = vmax.f32 %v791, %v792
      %v794 = vsel %vm751, %v649, -inf
      %v795 = vrot.slane %v794, 4
      %v796 = vmax.f32 %v794, %v795
      %v797 = vrot.slane %v796, 2
      %v798 = vmax.f32 %v796, %v797
      %v799 = vrot.slane %v798, 1
      %v800 = vmax.f32 %v798, %v799
      %v801 = vsel %vm751, %v652, -inf
      %v802 = vrot.slane %v801, 4
      %v803 = vmax.f32 %v801, %v802
      %v804 = vrot.slane %v803, 2
      %v805 = vmax.f32 %v803, %v804
      %v806 = vrot.slane %v805, 1
      %v807 = vmax.f32 %v805, %v806
      %v808 = vsel %vm751, %v657, -inf
      %v809 = vrot.slane %v808, 4
      %v810 = vmax.f32 %v808, %v809
      %v811 = vrot.slane %v810, 2
      %v812 = vmax.f32 %v810, %v811
      %v813 = vrot.slane %v812, 1
      %v814 = vmax.f32 %v812, %v813
      %v815 = vsel %vm751, %v660, -inf
      %v816 = vrot.slane %v815, 4
      %v817 = vmax.f32 %v815, %v816
      %v818 = vrot.slane %v817, 2
      %v819 = vmax.f32 %v817, %v818
      %v820 = vrot.slane %v819, 1
      %v821 = vmax.f32 %v819, %v820
      %v822 = vsel %vm751, %v665, -inf
      %v823 = vrot.slane %v822, 4
      %v824 = vmax.f32 %v822, %v823
      %v825 = vrot.slane %v824, 2
      %v826 = vmax.f32 %v824, %v825
      %v827 = vrot.slane %v826, 1
      %v828 = vmax.f32 %v826, %v827
      %v829 = vsel %vm751, %v668, -inf
      %v830 = vrot.slane %v829, 4
      %v831 = vmax.f32 %v829, %v830
      %v832 = vrot.slane %v831, 2
      %v833 = vmax.f32 %v831, %v832
      %v834 = vrot.slane %v833, 1
      %v835 = vmax.f32 %v833, %v834
      %v836 = vsel %vm751, %v673, -inf
      %v837 = vrot.slane %v836, 4
      %v838 = vmax.f32 %v836, %v837
      %v839 = vrot.slane %v838, 2
      %v840 = vmax.f32 %v838, %v839
      %v841 = vrot.slane %v840, 1
      %v842 = vmax.f32 %v840, %v841
      %v843 = vsel %vm751, %v676, -inf
      %v844 = vrot.slane %v843, 4
      %v845 = vmax.f32 %v843, %v844
      %v846 = vrot.slane %v845, 2
      %v847 = vmax.f32 %v845, %v846
      %v848 = vrot.slane %v847, 1
      %v849 = vmax.f32 %v847, %v848
      %v850 = vsel %vm751, %v681, -inf
      %v851 = vrot.slane %v850, 4
      %v852 = vmax.f32 %v850, %v851
      %v853 = vrot.slane %v852, 2
      %v854 = vmax.f32 %v852, %v853
      %v855 = vrot.slane %v854, 1
      %v856 = vmax.f32 %v854, %v855
      %v857 = vsel %vm751, %v684, -inf
      %v858 = vrot.slane %v857, 4
      %v859 = vmax.f32 %v857, %v858
      %v860 = vrot.slane %v859, 2
      %v861 = vmax.f32 %v859, %v860
      %v862 = vrot.slane %v861, 1
      %v863 = vmax.f32 %v861, %v862
      %v864 = vsel %vm751, %v689, -inf
      %v865 = vrot.slane %v864, 4
      %v866 = vmax.f32 %v864, %v865
      %v867 = vrot.slane %v866, 2
      %v868 = vmax.f32 %v866, %v867
      %v869 = vrot.slane %v868, 1
      %v870 = vmax.f32 %v868, %v869
      %v871 = vsel %vm751, %v692, -inf
      %v872 = vrot.slane %v871, 4
      %v873 = vmax.f32 %v871, %v872
      %v874 = vrot.slane %v873, 2
      %v875 = vmax.f32 %v873, %v874
      %v876 = vrot.slane %v875, 1
      %v877 = vmax.f32 %v875, %v876
      %v878 = vsel %vm751, %v697, -inf
      %v879 = vrot.slane %v878, 4
      %v880 = vmax.f32 %v878, %v879
      %v881 = vrot.slane %v880, 2
      %v882 = vmax.f32 %v880, %v881
      %v883 = vrot.slane %v882, 1
      %v884 = vmax.f32 %v882, %v883
      %v885 = vsel %vm751, %v700, -inf
      %v886 = vrot.slane %v885, 4
      %v887 = vmax.f32 %v885, %v886
      %v888 = vrot.slane %v887, 2
      %v889 = vmax.f32 %v887, %v888
      %v890 = vrot.slane %v889, 1
      %v891 = vmax.f32 %v889, %v890
      %v892 = vsel %vm751, %v705, -inf
      %v893 = vrot.slane %v892, 4
      %v894 = vmax.f32 %v892, %v893
      %v895 = vrot.slane %v894, 2
      %v896 = vmax.f32 %v894, %v895
      %v897 = vrot.slane %v896, 1
      %v898 = vmax.f32 %v896, %v897
      %v899 = vsel %vm751, %v708, -inf
      %v900 = vrot.slane %v899, 4
      %v901 = vmax.f32 %v899, %v900
      %v902 = vrot.slane %v901, 2
      %v903 = vmax.f32 %v901, %v902
      %v904 = vrot.slane %v903, 1
      %v905 = vmax.f32 %v903, %v904
      %v906 = vsel %vm751, %v713, -inf
      %v907 = vrot.slane %v906, 4
      %v908 = vmax.f32 %v906, %v907
      %v909 = vrot.slane %v908, 2
      %v910 = vmax.f32 %v908, %v909
      %v911 = vrot.slane %v910, 1
      %v912 = vmax.f32 %v910, %v911
      %v913 = vsel %vm751, %v716, -inf
      %v914 = vrot.slane %v913, 4
      %v915 = vmax.f32 %v913, %v914
      %v916 = vrot.slane %v915, 2
      %v917 = vmax.f32 %v915, %v916
      %v918 = vrot.slane %v917, 1
      %v919 = vmax.f32 %v917, %v918
      %v920 = vsel %vm751, %v721, -inf
      %v921 = vrot.slane %v920, 4
      %v922 = vmax.f32 %v920, %v921
      %v923 = vrot.slane %v922, 2
      %v924 = vmax.f32 %v922, %v923
      %v925 = vrot.slane %v924, 1
      %v926 = vmax.f32 %v924, %v925
      %v927 = vsel %vm751, %v724, -inf
      %v928 = vrot.slane %v927, 4
      %v929 = vmax.f32 %v927, %v928
      %v930 = vrot.slane %v929, 2
      %v931 = vmax.f32 %v929, %v930
      %v932 = vrot.slane %v931, 1
      %v933 = vmax.f32 %v931, %v932
      %v934 = vsel %vm751, %v729, -inf
      %v935 = vrot.slane %v934, 4
      %v936 = vmax.f32 %v934, %v935
      %v937 = vrot.slane %v936, 2
      %v938 = vmax.f32 %v936, %v937
      %v939 = vrot.slane %v938, 1
      %v940 = vmax.f32 %v938, %v939
      %v941 = vsel %vm751, %v732, -inf
      %v942 = vrot.slane %v941, 4
      %v943 = vmax.f32 %v941, %v942
      %v944 = vrot.slane %v943, 2
      %v945 = vmax.f32 %v943, %v944
      %v946 = vrot.slane %v945, 1
      %v947 = vmax.f32 %v945, %v946
      %v948 = vsel %vm751, %v737, -inf
      %v949 = vrot.slane %v948, 4
      %v950 = vmax.f32 %v948, %v949
      %v951 = vrot.slane %v950, 2
      %v952 = vmax.f32 %v950, %v951
      %v953 = vrot.slane %v952, 1
      %v954 = vmax.f32 %v952, %v953
      %v955 = vsel %vm751, %v740, -inf
      %v956 = vrot.slane %v955, 4
      %v957 = vmax.f32 %v955, %v956
      %v958 = vrot.slane %v957, 2
      %v959 = vmax.f32 %v957, %v958
      %v960 = vrot.slane %v959, 1
      %v961 = vmax.f32 %v959, %v960
      %v962 = vsel %vm751, %v745, -inf
      %v963 = vrot.slane %v962, 4
      %v964 = vmax.f32 %v962, %v963
      %v965 = vrot.slane %v964, 2
      %v966 = vmax.f32 %v964, %v965
      %v967 = vrot.slane %v966, 1
      %v968 = vmax.f32 %v966, %v967
      %v969 = vsel %vm751, %v748, -inf
      %v970 = vrot.slane %v969, 4
      %v971 = vmax.f32 %v969, %v970
      %v972 = vrot.slane %v971, 2
      %v973 = vmax.f32 %v971, %v972
      %v974 = vrot.slane %v973, 1
      %v975 = vmax.f32 %v973, %v974
      %v976 = vsub.f32 %v625, %v758
      %v977 = vsub.f32 %v628, %v765
      %v978 = vsub.f32 %v633, %v772
      %v979 = vsub.f32 %v636, %v779
      %v980 = vsub.f32 %v641, %v786
      %v981 = vsub.f32 %v644, %v793
      %v982 = vsub.f32 %v649, %v800
      %v983 = vsub.f32 %v652, %v807
      %v984 = vsub.f32 %v657, %v814
      %v985 = vsub.f32 %v660, %v821
      %v986 = vsub.f32 %v665, %v828
      %v987 = vsub.f32 %v668, %v835
      %v988 = vsub.f32 %v673, %v842
      %v989 = vsub.f32 %v676, %v849
      %v990 = vsub.f32 %v681, %v856
      %v991 = vsub.f32 %v684, %v863
      %v992 = vsub.f32 %v689, %v870
      %v993 = vsub.f32 %v692, %v877
      %v994 = vsub.f32 %v697, %v884
      %v995 = vsub.f32 %v700, %v891
      %v996 = vsub.f32 %v705, %v898
      %v997 = vsub.f32 %v708, %v905
      %v998 = vsub.f32 %v713, %v912
      %v999 = vsub.f32 %v716, %v919
      %v1000 = vsub.f32 %v721, %v926
      %v1001 = vsub.f32 %v724, %v933
      %v1002 = vsub.f32 %v729, %v940
      %v1003 = vsub.f32 %v732, %v947
      %v1004 = vsub.f32 %v737, %v954
      %v1005 = vsub.f32 %v740, %v961
      %v1006 = vsub.f32 %v745, %v968
      %v1007 = vsub.f32 %v748, %v975
      %v1008 = vmul.f32 %v976, 1.442695
      %v1009 = vpow.pop %v1008
      %v1010 = vmul.f32 %v977, 1.442695
      %v1011 = vpow.pop %v1010
      %v1012 = vmul.f32 %v978, 1.442695
      %v1013 = vpow.pop %v1012
      %v1014 = vmul.f32 %v979, 1.442695
      %v1015 = vpow.pop %v1014
      %v1016 = vmul.f32 %v980, 1.442695
      %v1017 = vpow.pop %v1016
      %v1018 = vmul.f32 %v981, 1.442695
      %v1019 = vpow.pop %v1018
      %v1020 = vmul.f32 %v982, 1.442695
      %v1021 = vpow.pop %v1020
      %v1022 = vmul.f32 %v983, 1.442695
      %v1023 = vpow.pop %v1022
      %v1024 = vmul.f32 %v984, 1.442695
      %v1025 = vpow.pop %v1024
      %v1026 = vmul.f32 %v985, 1.442695
      %v1027 = vpow.pop %v1026
      %v1028 = vmul.f32 %v986, 1.442695
      %v1029 = vpow.pop %v1028
      %v1030 = vmul.f32 %v987, 1.442695
      %v1031 = vpow.pop %v1030
      %v1032 = vmul.f32 %v988, 1.442695
      %v1033 = vpow.pop %v1032
      %v1034 = vmul.f32 %v989, 1.442695
      %v1035 = vpow.pop %v1034
      %v1036 = vmul.f32 %v990, 1.442695
      %v1037 = vpow.pop %v1036
      %v1038 = vmul.f32 %v991, 1.442695
      %v1039 = vpow.pop %v1038
      %v1040 = vmul.f32 %v992, 1.442695
      %v1041 = vpow.pop %v1040
      %v1042 = vmul.f32 %v993, 1.442695
      %v1043 = vpow.pop %v1042
      %v1044 = vmul.f32 %v994, 1.442695
      %v1045 = vpow.pop %v1044
      %v1046 = vmul.f32 %v995, 1.442695
      %v1047 = vpow.pop %v1046
      %v1048 = vmul.f32 %v996, 1.442695
      %v1049 = vpow.pop %v1048
      %v1050 = vmul.f32 %v997, 1.442695
      %v1051 = vpow.pop %v1050
      %v1052 = vmul.f32 %v998, 1.442695
      %v1053 = vpow.pop %v1052
      %v1054 = vmul.f32 %v999, 1.442695
      %v1055 = vpow.pop %v1054
      %v1056 = vmul.f32 %v1000, 1.442695
      %v1057 = vpow.pop %v1056
      %v1058 = vmul.f32 %v1001, 1.442695
      %v1059 = vpow.pop %v1058
      %v1060 = vmul.f32 %v1002, 1.442695
      %v1061 = vpow.pop %v1060
      %v1062 = vmul.f32 %v1003, 1.442695
      %v1063 = vpow.pop %v1062
      %v1064 = vmul.f32 %v1004, 1.442695
      %v1065 = vpow.pop %v1064
      %v1066 = vmul.f32 %v1005, 1.442695
      %v1067 = vpow.pop %v1066
      %v1068 = vmul.f32 %v1006, 1.442695
      %v1069 = vpow.pop %v1068
      %v1070 = vmul.f32 %v1007, 1.442695
      %v1071 = vpow.pop %v1070
      %v1072 = vsel %vm751, %v1009, 0.0
      %v1073 = vrot.slane %v1072, 4
      %v1074 = vadd.f32 %v1072, %v1073
      %v1075 = vrot.slane %v1074, 2
      %v1076 = vadd.f32 %v1074, %v1075
      %v1077 = vrot.slane %v1076, 1
      %v1078 = vadd.f32 %v1076, %v1077
      %v1079 = vsel %vm751, %v1011, 0.0
      %v1080 = vrot.slane %v1079, 4
      %v1081 = vadd.f32 %v1079, %v1080
      %v1082 = vrot.slane %v1081, 2
      %v1083 = vadd.f32 %v1081, %v1082
      %v1084 = vrot.slane %v1083, 1
      %v1085 = vadd.f32 %v1083, %v1084
      %v1086 = vsel %vm751, %v1013, 0.0
      %v1087 = vrot.slane %v1086, 4
      %v1088 = vadd.f32 %v1086, %v1087
      %v1089 = vrot.slane %v1088, 2
      %v1090 = vadd.f32 %v1088, %v1089
      %v1091 = vrot.slane %v1090, 1
      %v1092 = vadd.f32 %v1090, %v1091
      %v1093 = vsel %vm751, %v1015, 0.0
      %v1094 = vrot.slane %v1093, 4
      %v1095 = vadd.f32 %v1093, %v1094
      %v1096 = vrot.slane %v1095, 2
      %v1097 = vadd.f32 %v1095, %v1096
      %v1098 = vrot.slane %v1097, 1
      %v1099 = vadd.f32 %v1097, %v1098
      %v1100 = vsel %vm751, %v1017, 0.0
      %v1101 = vrot.slane %v1100, 4
      %v1102 = vadd.f32 %v1100, %v1101
      %v1103 = vrot.slane %v1102, 2
      %v1104 = vadd.f32 %v1102, %v1103
      %v1105 = vrot.slane %v1104, 1
      %v1106 = vadd.f32 %v1104, %v1105
      %v1107 = vsel %vm751, %v1019, 0.0
      %v1108 = vrot.slane %v1107, 4
      %v1109 = vadd.f32 %v1107, %v1108
      %v1110 = vrot.slane %v1109, 2
      %v1111 = vadd.f32 %v1109, %v1110
      %v1112 = vrot.slane %v1111, 1
      %v1113 = vadd.f32 %v1111, %v1112
      %v1114 = vsel %vm751, %v1021, 0.0
      %v1115 = vrot.slane %v1114, 4
      %v1116 = vadd.f32 %v1114, %v1115
      %v1117 = vrot.slane %v1116, 2
      %v1118 = vadd.f32 %v1116, %v1117
      %v1119 = vrot.slane %v1118, 1
      %v1120 = vadd.f32 %v1118, %v1119
      %v1121 = vsel %vm751, %v1023, 0.0
      %v1122 = vrot.slane %v1121, 4
      %v1123 = vadd.f32 %v1121, %v1122
      %v1124 = vrot.slane %v1123, 2
      %v1125 = vadd.f32 %v1123, %v1124
      %v1126 = vrot.slane %v1125, 1
      %v1127 = vadd.f32 %v1125, %v1126
      %v1128 = vsel %vm751, %v1025, 0.0
      %v1129 = vrot.slane %v1128, 4
      %v1130 = vadd.f32 %v1128, %v1129
      %v1131 = vrot.slane %v1130, 2
      %v1132 = vadd.f32 %v1130, %v1131
      %v1133 = vrot.slane %v1132, 1
      %v1134 = vadd.f32 %v1132, %v1133
      %v1135 = vsel %vm751, %v1027, 0.0
      %v1136 = vrot.slane %v1135, 4
      %v1137 = vadd.f32 %v1135, %v1136
      %v1138 = vrot.slane %v1137, 2
      %v1139 = vadd.f32 %v1137, %v1138
      %v1140 = vrot.slane %v1139, 1
      %v1141 = vadd.f32 %v1139, %v1140
      %v1142 = vsel %vm751, %v1029, 0.0
      %v1143 = vrot.slane %v1142, 4
      %v1144 = vadd.f32 %v1142, %v1143
      %v1145 = vrot.slane %v1144, 2
      %v1146 = vadd.f32 %v1144, %v1145
      %v1147 = vrot.slane %v1146, 1
      %v1148 = vadd.f32 %v1146, %v1147
      %v1149 = vsel %vm751, %v1031, 0.0
      %v1150 = vrot.slane %v1149, 4
      %v1151 = vadd.f32 %v1149, %v1150
      %v1152 = vrot.slane %v1151, 2
      %v1153 = vadd.f32 %v1151, %v1152
      %v1154 = vrot.slane %v1153, 1
      %v1155 = vadd.f32 %v1153, %v1154
      %v1156 = vsel %vm751, %v1033, 0.0
      %v1157 = vrot.slane %v1156, 4
      %v1158 = vadd.f32 %v1156, %v1157
      %v1159 = vrot.slane %v1158, 2
      %v1160 = vadd.f32 %v1158, %v1159
      %v1161 = vrot.slane %v1160, 1
      %v1162 = vadd.f32 %v1160, %v1161
      %v1163 = vsel %vm751, %v1035, 0.0
      %v1164 = vrot.slane %v1163, 4
      %v1165 = vadd.f32 %v1163, %v1164
      %v1166 = vrot.slane %v1165, 2
      %v1167 = vadd.f32 %v1165, %v1166
      %v1168 = vrot.slane %v1167, 1
      %v1169 = vadd.f32 %v1167, %v1168
      %v1170 = vsel %vm751, %v1037, 0.0
      %v1171 = vrot.slane %v1170, 4
      %v1172 = vadd.f32 %v1170, %v1171
      %v1173 = vrot.slane %v1172, 2
      %v1174 = vadd.f32 %v1172, %v1173
      %v1175 = vrot.slane %v1174, 1
      %v1176 = vadd.f32 %v1174, %v1175
      %v1177 = vsel %vm751, %v1039, 0.0
      %v1178 = vrot.slane %v1177, 4
      %v1179 = vadd.f32 %v1177, %v1178
      %v1180 = vrot.slane %v1179, 2
      %v1181 = vadd.f32 %v1179, %v1180
      %v1182 = vrot.slane %v1181, 1
      %v1183 = vadd.f32 %v1181, %v1182
      %v1184 = vsel %vm751, %v1041, 0.0
      %v1185 = vrot.slane %v1184, 4
      %v1186 = vadd.f32 %v1184, %v1185
      %v1187 = vrot.slane %v1186, 2
      %v1188 = vadd.f32 %v1186, %v1187
      %v1189 = vrot.slane %v1188, 1
      %v1190 = vadd.f32 %v1188, %v1189
      %v1191 = vsel %vm751, %v1043, 0.0
      %v1192 = vrot.slane %v1191, 4
      %v1193 = vadd.f32 %v1191, %v1192
      %v1194 = vrot.slane %v1193, 2
      %v1195 = vadd.f32 %v1193, %v1194
      %v1196 = vrot.slane %v1195, 1
      %v1197 = vadd.f32 %v1195, %v1196
      %v1198 = vsel %vm751, %v1045, 0.0
      %v1199 = vrot.slane %v1198, 4
      %v1200 = vadd.f32 %v1198, %v1199
      %v1201 = vrot.slane %v1200, 2
      %v1202 = vadd.f32 %v1200, %v1201
      %v1203 = vrot.slane %v1202, 1
      %v1204 = vadd.f32 %v1202, %v1203
      %v1205 = vsel %vm751, %v1047, 0.0
      %v1206 = vrot.slane %v1205, 4
      %v1207 = vadd.f32 %v1205, %v1206
      %v1208 = vrot.slane %v1207, 2
      %v1209 = vadd.f32 %v1207, %v1208
      %v1210 = vrot.slane %v1209, 1
      %v1211 = vadd.f32 %v1209, %v1210
      %v1212 = vsel %vm751, %v1049, 0.0
      %v1213 = vrot.slane %v1212, 4
      %v1214 = vadd.f32 %v1212, %v1213
      %v1215 = vrot.slane %v1214, 2
      %v1216 = vadd.f32 %v1214, %v1215
      %v1217 = vrot.slane %v1216, 1
      %v1218 = vadd.f32 %v1216, %v1217
      %v1219 = vsel %vm751, %v1051, 0.0
      %v1220 = vrot.slane %v1219, 4
      %v1221 = vadd.f32 %v1219, %v1220
      %v1222 = vrot.slane %v1221, 2
      %v1223 = vadd.f32 %v1221, %v1222
      %v1224 = vrot.slane %v1223, 1
      %v1225 = vadd.f32 %v1223, %v1224
      %v1226 = vsel %vm751, %v1053, 0.0
      %v1227 = vrot.slane %v1226, 4
      %v1228 = vadd.f32 %v1226, %v1227
      %v1229 = vrot.slane %v1228, 2
      %v1230 = vadd.f32 %v1228, %v1229
      %v1231 = vrot.slane %v1230, 1
      %v1232 = vadd.f32 %v1230, %v1231
      %v1233 = vsel %vm751, %v1055, 0.0
      %v1234 = vrot.slane %v1233, 4
      %v1235 = vadd.f32 %v1233, %v1234
      %v1236 = vrot.slane %v1235, 2
      %v1237 = vadd.f32 %v1235, %v1236
      %v1238 = vrot.slane %v1237, 1
      %v1239 = vadd.f32 %v1237, %v1238
      %v1240 = vsel %vm751, %v1057, 0.0
      %v1241 = vrot.slane %v1240, 4
      %v1242 = vadd.f32 %v1240, %v1241
      %v1243 = vrot.slane %v1242, 2
      %v1244 = vadd.f32 %v1242, %v1243
      %v1245 = vrot.slane %v1244, 1
      %v1246 = vadd.f32 %v1244, %v1245
      %v1247 = vsel %vm751, %v1059, 0.0
      %v1248 = vrot.slane %v1247, 4
      %v1249 = vadd.f32 %v1247, %v1248
      %v1250 = vrot.slane %v1249, 2
      %v1251 = vadd.f32 %v1249, %v1250
      %v1252 = vrot.slane %v1251, 1
      %v1253 = vadd.f32 %v1251, %v1252
      %v1254 = vsel %vm751, %v1061, 0.0
      %v1255 = vrot.slane %v1254, 4
      %v1256 = vadd.f32 %v1254, %v1255
      %v1257 = vrot.slane %v1256, 2
      %v1258 = vadd.f32 %v1256, %v1257
      %v1259 = vrot.slane %v1258, 1
      %v1260 = vadd.f32 %v1258, %v1259
      %v1261 = vsel %vm751, %v1063, 0.0
      %v1262 = vrot.slane %v1261, 4
      %v1263 = vadd.f32 %v1261, %v1262
      %v1264 = vrot.slane %v1263, 2
      %v1265 = vadd.f32 %v1263, %v1264
      %v1266 = vrot.slane %v1265, 1
      %v1267 = vadd.f32 %v1265, %v1266
      %v1268 = vsel %vm751, %v1065, 0.0
      %v1269 = vrot.slane %v1268, 4
      %v1270 = vadd.f32 %v1268, %v1269
      %v1271 = vrot.slane %v1270, 2
      %v1272 = vadd.f32 %v1270, %v1271
      %v1273 = vrot.slane %v1272, 1
      %v1274 = vadd.f32 %v1272, %v1273
      %v1275 = vsel %vm751, %v1067, 0.0
      %v1276 = vrot.slane %v1275, 4
      %v1277 = vadd.f32 %v1275, %v1276
      %v1278 = vrot.slane %v1277, 2
      %v1279 = vadd.f32 %v1277, %v1278
      %v1280 = vrot.slane %v1279, 1
      %v1281 = vadd.f32 %v1279, %v1280
      %v1282 = vsel %vm751, %v1069, 0.0
      %v1283 = vrot.slane %v1282, 4
      %v1284 = vadd.f32 %v1282, %v1283
      %v1285 = vrot.slane %v1284, 2
      %v1286 = vadd.f32 %v1284, %v1285
      %v1287 = vrot.slane %v1286, 1
      %v1288 = vadd.f32 %v1286, %v1287
      %v1289 = vsel %vm751, %v1071, 0.0
      %v1290 = vrot.slane %v1289, 4
      %v1291 = vadd.f32 %v1289, %v1290
      %v1292 = vrot.slane %v1291, 2
      %v1293 = vadd.f32 %v1291, %v1292
      %v1294 = vrot.slane %v1293, 1
      %v1295 = vadd.f32 %v1293, %v1294
      %v1296 = vrcp.pop %v1078
      %v1297 = vrcp.pop %v1085
      %v1298 = vrcp.pop %v1092
      %v1299 = vrcp.pop %v1099
      %v1300 = vrcp.pop %v1106
      %v1301 = vrcp.pop %v1113
      %v1302 = vrcp.pop %v1120
      %v1303 = vrcp.pop %v1127
      %v1304 = vrcp.pop %v1134
      %v1305 = vrcp.pop %v1141
      %v1306 = vrcp.pop %v1148
      %v1307 = vrcp.pop %v1155
      %v1308 = vrcp.pop %v1162
      %v1309 = vrcp.pop %v1169
      %v1310 = vrcp.pop %v1176
      %v1311 = vrcp.pop %v1183
      %v1312 = vrcp.pop %v1190
      %v1313 = vrcp.pop %v1197
      %v1314 = vrcp.pop %v1204
      %v1315 = vrcp.pop %v1211
      %v1316 = vrcp.pop %v1218
      %v1317 = vrcp.pop %v1225
      %v1318 = vrcp.pop %v1232
      %v1319 = vrcp.pop %v1239
      %v1320 = vrcp.pop %v1246
      %v1321 = vrcp.pop %v1253
      %v1322 = vrcp.pop %v1260
      %v1323 = vrcp.pop %v1267
      %v1324 = vrcp.pop %v1274
      %v1325 = vrcp.pop %v1281
      %v1326 = vrcp.pop %v1288
      %v1327 = vrcp.pop %v1295
      %v1328 = vmul.f32 %v1009, %v1296
      %v1329 = vmul.f32 %v1011, %v1297
      %v1330 = vmul.f32 %v1013, %v1298
      %v1331 = vmul.f32 %v1015, %v1299
      %v1332 = vmul.f32 %v1017, %v1300
      %v1333 = vmul.f32 %v1019, %v1301
      %v1334 = vmul.f32 %v1021, %v1302
      %v1335 = vmul.f32 %v1023, %v1303
      %v1336 = vmul.f32 %v1025, %v1304
      %v1337 = vmul.f32 %v1027, %v1305
      %v1338 = vmul.f32 %v1029, %v1306
      %v1339 = vmul.f32 %v1031, %v1307
      %v1340 = vmul.f32 %v1033, %v1308
      %v1341 = vmul.f32 %v1035, %v1309
      %v1342 = vmul.f32 %v1037, %v1310
      %v1343 = vmul.f32 %v1039, %v1311
      %v1344 = vmul.f32 %v1041, %v1312
      %v1345 = vmul.f32 %v1043, %v1313
      %v1346 = vmul.f32 %v1045, %v1314
      %v1347 = vmul.f32 %v1047, %v1315
      %v1348 = vmul.f32 %v1049, %v1316
      %v1349 = vmul.f32 %v1051, %v1317
      %v1350 = vmul.f32 %v1053, %v1318
      %v1351 = vmul.f32 %v1055, %v1319
      %v1352 = vmul.f32 %v1057, %v1320
      %v1353 = vmul.f32 %v1059, %v1321
      %v1354 = vmul.f32 %v1061, %v1322
      %v1355 = vmul.f32 %v1063, %v1323
      %v1356 = vmul.f32 %v1065, %v1324
      %v1357 = vmul.f32 %v1067, %v1325
      %v1358 = vmul.f32 %v1069, %v1326
      %v1359 = vmul.f32 %v1071, %v1327
      %v1360 = vld [vmem:[%s4] sm:$0xf]
      %v1362 = vsel %vm751, %v1328, 0
      %v1365 = vsel %vm751, %v1329, 0
      %v1368 = vsel %vm751, %v1330, 0
      %v1371 = vsel %vm751, %v1331, 0
      %v1374 = vsel %vm751, %v1332, 0
      %v1377 = vsel %vm751, %v1333, 0
      %v1380 = vsel %vm751, %v1334, 0
      %v1383 = vsel %vm751, %v1335, 0
      %v1386 = vsel %vm751, %v1336, 0
      %v1389 = vsel %vm751, %v1337, 0
      %v1392 = vsel %vm751, %v1338, 0
      %v1395 = vsel %vm751, %v1339, 0
      %v1398 = vsel %vm751, %v1340, 0
      %v1401 = vsel %vm751, %v1341, 0
      %v1404 = vsel %vm751, %v1342, 0
      %v1407 = vsel %vm751, %v1343, 0
      %v1410 = vsel %vm751, %v1344, 0
      %v1413 = vsel %vm751, %v1345, 0
      %v1416 = vsel %vm751, %v1346, 0
      %v1419 = vsel %vm751, %v1347, 0
      %v1422 = vsel %vm751, %v1348, 0
      %v1425 = vsel %vm751, %v1349, 0
      %v1428 = vsel %vm751, %v1350, 0
      %v1431 = vsel %vm751, %v1351, 0
      %v1434 = vsel %vm751, %v1352, 0
      %v1437 = vsel %vm751, %v1353, 0
      %v1440 = vsel %vm751, %v1354, 0
      %v1443 = vsel %vm751, %v1355, 0
      %v1446 = vsel %vm751, %v1356, 0
      %v1449 = vsel %vm751, %v1357, 0
      %v1452 = vsel %vm751, %v1358, 0
      %v1455 = vsel %vm751, %v1359, 0
      %vm1457 = vcmask 1043456
      %v1459 = vsel %vm1457, %v1360, 0
      %1461 = vmatprep.subr.mxu0 0.0
      %1462 = vmatpush1.msra.mxu0 0.0
      %1463 = vmatprep.subr.mxu0 0.0
      %1464 = vmatpush1.msra.mxu0 0.0
      %1465 = vmatprep.subr.mxu0 0.0
      %1466 = vmatpush1.msra.mxu0 0.0
      %1467 = vmatprep.subr.mxu0 0.0
      %1468 = vmatpush1.msra.mxu0 0.0
      %1469 = vmatprep.subr.mxu0 0.0
      %1470 = vmatpush1.msra.mxu0 0.0
      %1471 = vmatprep.subr.mxu0 0.0
      %1472 = vmatpush1.msra.mxu0 0.0
      %1473 = vmatprep.subr.mxu0 0.0
      %1474 = vmatpush1.msra.mxu0 0.0
      %1475 = vmatprep.subr.mxu0 0.0
      %1476 = vmatpush1.msra.mxu0 0.0
      %1477 = vmatprep.subr.mxu0 0.0
      %1478 = vmatpush1.msra.mxu0 0.0
      %1479 = vmatprep.subr.mxu0 0.0
      %1480 = vmatpush1.msra.mxu0 0.0
      %1481 = vmatprep.subr.mxu0 0.0
      %1482 = vmatpush1.msra.mxu0 0.0
      %1483 = vmatprep.subr.mxu0 0.0
      %1484 = vmatpush1.msra.mxu0 0.0
      %1485 = vmatprep.subr.mxu0 0.0
      %1486 = vmatpush1.msra.mxu0 0.0
      %1487 = vmatprep.subr.mxu0 0.0
      %1488 = vmatpush1.msra.mxu0 0.0
      %1489 = vmatprep.subr.mxu0 0.0
      %1490 = vmatpush1.msra.mxu0 0.0
      %1491 = vmatprep.subr.mxu0 0.0
      %1492 = vmatpush1.msra.mxu0 %v1459
      %1493 = vmatprep.subr.mxu0 0.0
      %1494 = vmatpush2.msra.mxu0 0.0
      %1495 = vmatprep.subr.mxu0 0.0
      %1496 = vmatpush2.msra.mxu0 0.0
      %1497 = vmatprep.subr.mxu0 0.0
      %1498 = vmatpush2.msra.mxu0 0.0
      %1499 = vmatprep.subr.mxu0 0.0
      %1500 = vmatpush2.msra.mxu0 0.0
      %1501 = vmatprep.subr.mxu0 0.0
      %1502 = vmatpush2.msra.mxu0 0.0
      %1503 = vmatprep.subr.mxu0 0.0
      %1504 = vmatpush2.msra.mxu0 0.0
      %1505 = vmatprep.subr.mxu0 0.0
      %1506 = vmatpush2.msra.mxu0 0.0
      %1507 = vmatprep.subr.mxu0 0.0
      %1508 = vmatpush2.msra.mxu0 0.0
      %1509 = vmatprep.subr.mxu0 0.0
      %1510 = vmatpush2.msra.mxu0 0.0
      %1511 = vmatprep.subr.mxu0 0.0
      %1512 = vmatpush2.msra.mxu0 0.0
      %1513 = vmatprep.subr.mxu0 0.0
      %1514 = vmatpush2.msra.mxu0 0.0
      %1515 = vmatprep.subr.mxu0 0.0
      %1516 = vmatpush2.msra.mxu0 0.0
      %1517 = vmatprep.subr.mxu0 0.0
      %1518 = vmatpush2.msra.mxu0 0.0
      %1519 = vmatprep.subr.mxu0 0.0
      %1520 = vmatpush2.msra.mxu0 0.0
      %1521 = vmatprep.subr.mxu0 0.0
      %1522 = vmatpush2.msra.mxu0 0.0
      %1523 = vmatprep.subr.mxu0 0.0
      %1524 = vmatpush2.msra.mxu0 0.0
      %1525 = vmatprep.mubr.f32.mxu0 0.0
      %1526 = vmatmul.mubr.f32.gmra.mxu0 %v1362
      %v1527 = vpop.f32.mrf.mxu0
      %v1528 = vadd.f32 0.0, %v1527
      %v1529 = vpop.f32.mrf.mxu0
      %1530 = vmatprep.mubr.f32.mxu0 0.0
      %1531 = vmatmul.mubr.f32.gmra.mxu0 %v1365
      %v1532 = vpop.f32.mrf.mxu0
      %v1533 = vadd.f32 0.0, %v1532
      %v1534 = vpop.f32.mrf.mxu0
      %1535 = vmatprep.mubr.f32.mxu0 0.0
      %1536 = vmatmul.mubr.f32.gmra.mxu0 %v1368
      %v1537 = vpop.f32.mrf.mxu0
      %v1538 = vadd.f32 0.0, %v1537
      %v1539 = vpop.f32.mrf.mxu0
      %1540 = vmatprep.mubr.f32.mxu0 0.0
      %1541 = vmatmul.mubr.f32.gmra.mxu0 %v1371
      %v1542 = vpop.f32.mrf.mxu0
      %v1543 = vadd.f32 0.0, %v1542
      %v1544 = vpop.f32.mrf.mxu0
      %1545 = vmatprep.mubr.f32.mxu0 0.0
      %1546 = vmatmul.mubr.f32.gmra.mxu0 %v1374
      %v1547 = vpop.f32.mrf.mxu0
      %v1548 = vadd.f32 0.0, %v1547
      %v1549 = vpop.f32.mrf.mxu0
      %1550 = vmatprep.mubr.f32.mxu0 0.0
      %1551 = vmatmul.mubr.f32.gmra.mxu0 %v1377
      %v1552 = vpop.f32.mrf.mxu0
      %v1553 = vadd.f32 0.0, %v1552
      %v1554 = vpop.f32.mrf.mxu0
      %1555 = vmatprep.mubr.f32.mxu0 0.0
      %1556 = vmatmul.mubr.f32.gmra.mxu0 %v1380
      %v1557 = vpop.f32.mrf.mxu0
      %v1558 = vadd.f32 0.0, %v1557
      %v1559 = vpop.f32.mrf.mxu0
      %1560 = vmatprep.mubr.f32.mxu0 0.0
      %1561 = vmatmul.mubr.f32.gmra.mxu0 %v1383
      %v1562 = vpop.f32.mrf.mxu0
      %v1563 = vadd.f32 0.0, %v1562
      %v1564 = vpop.f32.mrf.mxu0
      %1565 = vmatprep.mubr.f32.mxu0 0.0
      %1566 = vmatmul.mubr.f32.gmra.mxu0 %v1386
      %v1567 = vpop.f32.mrf.mxu0
      %v1568 = vadd.f32 0.0, %v1567
      %v1569 = vpop.f32.mrf.mxu0
      %1570 = vmatprep.mubr.f32.mxu0 0.0
      %1571 = vmatmul.mubr.f32.gmra.mxu0 %v1389
      %v1572 = vpop.f32.mrf.mxu0
      %v1573 = vadd.f32 0.0, %v1572
      %v1574 = vpop.f32.mrf.mxu0
      %1575 = vmatprep.mubr.f32.mxu0 0.0
      %1576 = vmatmul.mubr.f32.gmra.mxu0 %v1392
      %v1577 = vpop.f32.mrf.mxu0
      %v1578 = vadd.f32 0.0, %v1577
      %v1579 = vpop.f32.mrf.mxu0
      %1580 = vmatprep.mubr.f32.mxu0 0.0
      %1581 = vmatmul.mubr.f32.gmra.mxu0 %v1395
      %v1582 = vpop.f32.mrf.mxu0
      %v1583 = vadd.f32 0.0, %v1582
      %v1584 = vpop.f32.mrf.mxu0
      %1585 = vmatprep.mubr.f32.mxu0 0.0
      %1586 = vmatmul.mubr.f32.gmra.mxu0 %v1398
      %v1587 = vpop.f32.mrf.mxu0
      %v1588 = vadd.f32 0.0, %v1587
      %v1589 = vpop.f32.mrf.mxu0
      %1590 = vmatprep.mubr.f32.mxu0 0.0
      %1591 = vmatmul.mubr.f32.gmra.mxu0 %v1401
      %v1592 = vpop.f32.mrf.mxu0
      %v1593 = vadd.f32 0.0, %v1592
      %v1594 = vpop.f32.mrf.mxu0
      %1595 = vmatprep.mubr.f32.mxu0 0.0
      %1596 = vmatmul.mubr.f32.gmra.mxu0 %v1404
      %v1597 = vpop.f32.mrf.mxu0
      %v1598 = vadd.f32 0.0, %v1597
      %v1599 = vpop.f32.mrf.mxu0
      %1600 = vmatprep.mubr.f32.mxu0 0.0
      %1601 = vmatmul.mubr.f32.gmra.mxu0 %v1407
      %v1602 = vpop.f32.mrf.mxu0
      %v1603 = vadd.f32 0.0, %v1602
      %v1604 = vpop.f32.mrf.mxu0
      %1605 = vmatprep.mubr.f32.mxu0 0.0
      %1606 = vmatmul.mubr.f32.gmra.mxu0 %v1410
      %v1607 = vpop.f32.mrf.mxu0
      %v1608 = vadd.f32 0.0, %v1607
      %v1609 = vpop.f32.mrf.mxu0
      %1610 = vmatprep.mubr.f32.mxu0 0.0
      %1611 = vmatmul.mubr.f32.gmra.mxu0 %v1413
      %v1612 = vpop.f32.mrf.mxu0
      %v1613 = vadd.f32 0.0, %v1612
      %v1614 = vpop.f32.mrf.mxu0
      %1615 = vmatprep.mubr.f32.mxu0 0.0
      %1616 = vmatmul.mubr.f32.gmra.mxu0 %v1416
      %v1617 = vpop.f32.mrf.mxu0
      %v1618 = vadd.f32 0.0, %v1617
      %v1619 = vpop.f32.mrf.mxu0
      %1620 = vmatprep.mubr.f32.mxu0 0.0
      %1621 = vmatmul.mubr.f32.gmra.mxu0 %v1419
      %v1622 = vpop.f32.mrf.mxu0
      %v1623 = vadd.f32 0.0, %v1622
      %v1624 = vpop.f32.mrf.mxu0
      %1625 = vmatprep.mubr.f32.mxu0 0.0
      %1626 = vmatmul.mubr.f32.gmra.mxu0 %v1422
      %v1627 = vpop.f32.mrf.mxu0
      %v1628 = vadd.f32 0.0, %v1627
      %v1629 = vpop.f32.mrf.mxu0
      %1630 = vmatprep.mubr.f32.mxu0 0.0
      %1631 = vmatmul.mubr.f32.gmra.mxu0 %v1425
      %v1632 = vpop.f32.mrf.mxu0
      %v1633 = vadd.f32 0.0, %v1632
      %v1634 = vpop.f32.mrf.mxu0
      %1635 = vmatprep.mubr.f32.mxu0 0.0
      %1636 = vmatmul.mubr.f32.gmra.mxu0 %v1428
      %v1637 = vpop.f32.mrf.mxu0
      %v1638 = vadd.f32 0.0, %v1637
      %v1639 = vpop.f32.mrf.mxu0
      %1640 = vmatprep.mubr.f32.mxu0 0.0
      %1641 = vmatmul.mubr.f32.gmra.mxu0 %v1431
      %v1642 = vpop.f32.mrf.mxu0
      %v1643 = vadd.f32 0.0, %v1642
      %v1644 = vpop.f32.mrf.mxu0
      %1645 = vmatprep.mubr.f32.mxu0 0.0
      %1646 = vmatmul.mubr.f32.gmra.mxu0 %v1434
      %v1647 = vpop.f32.mrf.mxu0
      %v1648 = vadd.f32 0.0, %v1647
      %v1649 = vpop.f32.mrf.mxu0
      %1650 = vmatprep.mubr.f32.mxu0 0.0
      %1651 = vmatmul.mubr.f32.gmra.mxu0 %v1437
      %v1652 = vpop.f32.mrf.mxu0
      %v1653 = vadd.f32 0.0, %v1652
      %v1654 = vpop.f32.mrf.mxu0
      %1655 = vmatprep.mubr.f32.mxu0 0.0
      %1656 = vmatmul.mubr.f32.gmra.mxu0 %v1440
      %v1657 = vpop.f32.mrf.mxu0
      %v1658 = vadd.f32 0.0, %v1657
      %v1659 = vpop.f32.mrf.mxu0
      %1660 = vmatprep.mubr.f32.mxu0 0.0
      %1661 = vmatmul.mubr.f32.gmra.mxu0 %v1443
      %v1662 = vpop.f32.mrf.mxu0
      %v1663 = vadd.f32 0.0, %v1662
      %v1664 = vpop.f32.mrf.mxu0
      %1665 = vmatprep.mubr.f32.mxu0 0.0
      %1666 = vmatmul.mubr.f32.gmra.mxu0 %v1446
      %v1667 = vpop.f32.mrf.mxu0
      %v1668 = vadd.f32 0.0, %v1667
      %v1669 = vpop.f32.mrf.mxu0
      %1670 = vmatprep.mubr.f32.mxu0 0.0
      %1671 = vmatmul.mubr.f32.gmra.mxu0 %v1449
      %v1672 = vpop.f32.mrf.mxu0
      %v1673 = vadd.f32 0.0, %v1672
      %v1674 = vpop.f32.mrf.mxu0
      %1675 = vmatprep.mubr.f32.mxu0 0.0
      %1676 = vmatmul.mubr.f32.gmra.mxu0 %v1452
      %v1677 = vpop.f32.mrf.mxu0
      %v1678 = vadd.f32 0.0, %v1677
      %v1679 = vpop.f32.mrf.mxu0
      %1680 = vmatprep.mubr.f32.mxu0 0.0
      %1681 = vmatmul.mubr.f32.gmra.mxu0 %v1455
      %v1682 = vpop.f32.mrf.mxu0
      %v1683 = vadd.f32 0.0, %v1682
      %v1684 = vpop.f32.mrf.mxu0
      %1685 = vdwg.mxu0
      %v1686 = vmul.f32 %v1528, %v441
      %v1687 = vmul.f32 %v1533, %v444
      %v1688 = vmul.f32 %v1538, %v449
      %v1689 = vmul.f32 %v1543, %v452
      %v1690 = vmul.f32 %v1548, %v457
      %v1691 = vmul.f32 %v1553, %v460
      %v1692 = vmul.f32 %v1558, %v465
      %v1693 = vmul.f32 %v1563, %v468
      %v1694 = vmul.f32 %v1568, %v473
      %v1695 = vmul.f32 %v1573, %v476
      %v1696 = vmul.f32 %v1578, %v481
      %v1697 = vmul.f32 %v1583, %v484
      %v1698 = vmul.f32 %v1588, %v489
      %v1699 = vmul.f32 %v1593, %v492
      %v1700 = vmul.f32 %v1598, %v497
      %v1701 = vmul.f32 %v1603, %v500
      %v1702 = vmul.f32 %v1608, %v505
      %v1703 = vmul.f32 %v1613, %v508
      %v1704 = vmul.f32 %v1618, %v513
      %v1705 = vmul.f32 %v1623, %v516
      %v1706 = vmul.f32 %v1628, %v521
      %v1707 = vmul.f32 %v1633, %v524
      %v1708 = vmul.f32 %v1638, %v529
      %v1709 = vmul.f32 %v1643, %v532
      %v1710 = vmul.f32 %v1648, %v537
      %v1711 = vmul.f32 %v1653, %v540
      %v1712 = vmul.f32 %v1658, %v545
      %v1713 = vmul.f32 %v1663, %v548
      %v1714 = vmul.f32 %v1668, %v553
      %v1715 = vmul.f32 %v1673, %v556
      %v1716 = vmul.f32 %v1678, %v561
      %v1717 = vmul.f32 %v1683, %v564
      %v1718 = vsel %vm357, %v1686, 0.0
      %v1719 = vrot.slane %v1718, 4
      %v1720 = vadd.f32 %v1718, %v1719
      %v1721 = vrot.slane %v1720, 2
      %v1722 = vadd.f32 %v1720, %v1721
      %v1723 = vrot.slane %v1722, 1
      %v1724 = vadd.f32 %v1722, %v1723
      %v1725 = vsel %vm357, %v1687, 0.0
      %v1726 = vrot.slane %v1725, 4
      %v1727 = vadd.f32 %v1725, %v1726
      %v1728 = vrot.slane %v1727, 2
      %v1729 = vadd.f32 %v1727, %v1728
      %v1730 = vrot.slane %v1729, 1
      %v1731 = vadd.f32 %v1729, %v1730
      %v1732 = vsel %vm357, %v1688, 0.0
      %v1733 = vrot.slane %v1732, 4
      %v1734 = vadd.f32 %v1732, %v1733
      %v1735 = vrot.slane %v1734, 2
      %v1736 = vadd.f32 %v1734, %v1735
      %v1737 = vrot.slane %v1736, 1
      %v1738 = vadd.f32 %v1736, %v1737
      %v1739 = vsel %vm357, %v1689, 0.0
      %v1740 = vrot.slane %v1739, 4
      %v1741 = vadd.f32 %v1739, %v1740
      %v1742 = vrot.slane %v1741, 2
      %v1743 = vadd.f32 %v1741, %v1742
      %v1744 = vrot.slane %v1743, 1
      %v1745 = vadd.f32 %v1743, %v1744
      %v1746 = vsel %vm357, %v1690, 0.0
      %v1747 = vrot.slane %v1746, 4
      %v1748 = vadd.f32 %v1746, %v1747
      %v1749 = vrot.slane %v1748, 2
      %v1750 = vadd.f32 %v1748, %v1749
      %v1751 = vrot.slane %v1750, 1
      %v1752 = vadd.f32 %v1750, %v1751
      %v1753 = vsel %vm357, %v1691, 0.0
      %v1754 = vrot.slane %v1753, 4
      %v1755 = vadd.f32 %v1753, %v1754
      %v1756 = vrot.slane %v1755, 2
      %v1757 = vadd.f32 %v1755, %v1756
      %v1758 = vrot.slane %v1757, 1
      %v1759 = vadd.f32 %v1757, %v1758
      %v1760 = vsel %vm357, %v1692, 0.0
      %v1761 = vrot.slane %v1760, 4
      %v1762 = vadd.f32 %v1760, %v1761
      %v1763 = vrot.slane %v1762, 2
      %v1764 = vadd.f32 %v1762, %v1763
      %v1765 = vrot.slane %v1764, 1
      %v1766 = vadd.f32 %v1764, %v1765
      %v1767 = vsel %vm357, %v1693, 0.0
      %v1768 = vrot.slane %v1767, 4
      %v1769 = vadd.f32 %v1767, %v1768
      %v1770 = vrot.slane %v1769, 2
      %v1771 = vadd.f32 %v1769, %v1770
      %v1772 = vrot.slane %v1771, 1
      %v1773 = vadd.f32 %v1771, %v1772
      %v1774 = vsel %vm357, %v1694, 0.0
      %v1775 = vrot.slane %v1774, 4
      %v1776 = vadd.f32 %v1774, %v1775
      %v1777 = vrot.slane %v1776, 2
      %v1778 = vadd.f32 %v1776, %v1777
      %v1779 = vrot.slane %v1778, 1
      %v1780 = vadd.f32 %v1778, %v1779
      %v1781 = vsel %vm357, %v1695, 0.0
      %v1782 = vrot.slane %v1781, 4
      %v1783 = vadd.f32 %v1781, %v1782
      %v1784 = vrot.slane %v1783, 2
      %v1785 = vadd.f32 %v1783, %v1784
      %v1786 = vrot.slane %v1785, 1
      %v1787 = vadd.f32 %v1785, %v1786
      %v1788 = vsel %vm357, %v1696, 0.0
      %v1789 = vrot.slane %v1788, 4
      %v1790 = vadd.f32 %v1788, %v1789
      %v1791 = vrot.slane %v1790, 2
      %v1792 = vadd.f32 %v1790, %v1791
      %v1793 = vrot.slane %v1792, 1
      %v1794 = vadd.f32 %v1792, %v1793
      %v1795 = vsel %vm357, %v1697, 0.0
      %v1796 = vrot.slane %v1795, 4
      %v1797 = vadd.f32 %v1795, %v1796
      %v1798 = vrot.slane %v1797, 2
      %v1799 = vadd.f32 %v1797, %v1798
      %v1800 = vrot.slane %v1799, 1
      %v1801 = vadd.f32 %v1799, %v1800
      %v1802 = vsel %vm357, %v1698, 0.0
      %v1803 = vrot.slane %v1802, 4
      %v1804 = vadd.f32 %v1802, %v1803
      %v1805 = vrot.slane %v1804, 2
      %v1806 = vadd.f32 %v1804, %v1805
      %v1807 = vrot.slane %v1806, 1
      %v1808 = vadd.f32 %v1806, %v1807
      %v1809 = vsel %vm357, %v1699, 0.0
      %v1810 = vrot.slane %v1809, 4
      %v1811 = vadd.f32 %v1809, %v1810
      %v1812 = vrot.slane %v1811, 2
      %v1813 = vadd.f32 %v1811, %v1812
      %v1814 = vrot.slane %v1813, 1
      %v1815 = vadd.f32 %v1813, %v1814
      %v1816 = vsel %vm357, %v1700, 0.0
      %v1817 = vrot.slane %v1816, 4
      %v1818 = vadd.f32 %v1816, %v1817
      %v1819 = vrot.slane %v1818, 2
      %v1820 = vadd.f32 %v1818, %v1819
      %v1821 = vrot.slane %v1820, 1
      %v1822 = vadd.f32 %v1820, %v1821
      %v1823 = vsel %vm357, %v1701, 0.0
      %v1824 = vrot.slane %v1823, 4
      %v1825 = vadd.f32 %v1823, %v1824
      %v1826 = vrot.slane %v1825, 2
      %v1827 = vadd.f32 %v1825, %v1826
      %v1828 = vrot.slane %v1827, 1
      %v1829 = vadd.f32 %v1827, %v1828
      %v1830 = vsel %vm357, %v1702, 0.0
      %v1831 = vrot.slane %v1830, 4
      %v1832 = vadd.f32 %v1830, %v1831
      %v1833 = vrot.slane %v1832, 2
      %v1834 = vadd.f32 %v1832, %v1833
      %v1835 = vrot.slane %v1834, 1
      %v1836 = vadd.f32 %v1834, %v1835
      %v1837 = vsel %vm357, %v1703, 0.0
      %v1838 = vrot.slane %v1837, 4
      %v1839 = vadd.f32 %v1837, %v1838
      %v1840 = vrot.slane %v1839, 2
      %v1841 = vadd.f32 %v1839, %v1840
      %v1842 = vrot.slane %v1841, 1
      %v1843 = vadd.f32 %v1841, %v1842
      %v1844 = vsel %vm357, %v1704, 0.0
      %v1845 = vrot.slane %v1844, 4
      %v1846 = vadd.f32 %v1844, %v1845
      %v1847 = vrot.slane %v1846, 2
      %v1848 = vadd.f32 %v1846, %v1847
      %v1849 = vrot.slane %v1848, 1
      %v1850 = vadd.f32 %v1848, %v1849
      %v1851 = vsel %vm357, %v1705, 0.0
      %v1852 = vrot.slane %v1851, 4
      %v1853 = vadd.f32 %v1851, %v1852
      %v1854 = vrot.slane %v1853, 2
      %v1855 = vadd.f32 %v1853, %v1854
      %v1856 = vrot.slane %v1855, 1
      %v1857 = vadd.f32 %v1855, %v1856
      %v1858 = vsel %vm357, %v1706, 0.0
      %v1859 = vrot.slane %v1858, 4
      %v1860 = vadd.f32 %v1858, %v1859
      %v1861 = vrot.slane %v1860, 2
      %v1862 = vadd.f32 %v1860, %v1861
      %v1863 = vrot.slane %v1862, 1
      %v1864 = vadd.f32 %v1862, %v1863
      %v1865 = vsel %vm357, %v1707, 0.0
      %v1866 = vrot.slane %v1865, 4
      %v1867 = vadd.f32 %v1865, %v1866
      %v1868 = vrot.slane %v1867, 2
      %v1869 = vadd.f32 %v1867, %v1868
      %v1870 = vrot.slane %v1869, 1
      %v1871 = vadd.f32 %v1869, %v1870
      %v1872 = vsel %vm357, %v1708, 0.0
      %v1873 = vrot.slane %v1872, 4
      %v1874 = vadd.f32 %v1872, %v1873
      %v1875 = vrot.slane %v1874, 2
      %v1876 = vadd.f32 %v1874, %v1875
      %v1877 = vrot.slane %v1876, 1
      %v1878 = vadd.f32 %v1876, %v1877
      %v1879 = vsel %vm357, %v1709, 0.0
      %v1880 = vrot.slane %v1879, 4
      %v1881 = vadd.f32 %v1879, %v1880
      %v1882 = vrot.slane %v1881, 2
      %v1883 = vadd.f32 %v1881, %v1882
      %v1884 = vrot.slane %v1883, 1
      %v1885 = vadd.f32 %v1883, %v1884
      %v1886 = vsel %vm357, %v1710, 0.0
      %v1887 = vrot.slane %v1886, 4
      %v1888 = vadd.f32 %v1886, %v1887
      %v1889 = vrot.slane %v1888, 2
      %v1890 = vadd.f32 %v1888, %v1889
      %v1891 = vrot.slane %v1890, 1
      %v1892 = vadd.f32 %v1890, %v1891
      %v1893 = vsel %vm357, %v1711, 0.0
      %v1894 = vrot.slane %v1893, 4
      %v1895 = vadd.f32 %v1893, %v1894
      %v1896 = vrot.slane %v1895, 2
      %v1897 = vadd.f32 %v1895, %v1896
      %v1898 = vrot.slane %v1897, 1
      %v1899 = vadd.f32 %v1897, %v1898
      %v1900 = vsel %vm357, %v1712, 0.0
      %v1901 = vrot.slane %v1900, 4
      %v1902 = vadd.f32 %v1900, %v1901
      %v1903 = vrot.slane %v1902, 2
      %v1904 = vadd.f32 %v1902, %v1903
      %v1905 = vrot.slane %v1904, 1
      %v1906 = vadd.f32 %v1904, %v1905
      %v1907 = vsel %vm357, %v1713, 0.0
      %v1908 = vrot.slane %v1907, 4
      %v1909 = vadd.f32 %v1907, %v1908
      %v1910 = vrot.slane %v1909, 2
      %v1911 = vadd.f32 %v1909, %v1910
      %v1912 = vrot.slane %v1911, 1
      %v1913 = vadd.f32 %v1911, %v1912
      %v1914 = vsel %vm357, %v1714, 0.0
      %v1915 = vrot.slane %v1914, 4
      %v1916 = vadd.f32 %v1914, %v1915
      %v1917 = vrot.slane %v1916, 2
      %v1918 = vadd.f32 %v1916, %v1917
      %v1919 = vrot.slane %v1918, 1
      %v1920 = vadd.f32 %v1918, %v1919
      %v1921 = vsel %vm357, %v1715, 0.0
      %v1922 = vrot.slane %v1921, 4
      %v1923 = vadd.f32 %v1921, %v1922
      %v1924 = vrot.slane %v1923, 2
      %v1925 = vadd.f32 %v1923, %v1924
      %v1926 = vrot.slane %v1925, 1
      %v1927 = vadd.f32 %v1925, %v1926
      %v1928 = vsel %vm357, %v1716, 0.0
      %v1929 = vrot.slane %v1928, 4
      %v1930 = vadd.f32 %v1928, %v1929
      %v1931 = vrot.slane %v1930, 2
      %v1932 = vadd.f32 %v1930, %v1931
      %v1933 = vrot.slane %v1932, 1
      %v1934 = vadd.f32 %v1932, %v1933
      %v1935 = vsel %vm357, %v1717, 0.0
      %v1936 = vrot.slane %v1935, 4
      %v1937 = vadd.f32 %v1935, %v1936
      %v1938 = vrot.slane %v1937, 2
      %v1939 = vadd.f32 %v1937, %v1938
      %v1940 = vrot.slane %v1939, 1
      %v1941 = vadd.f32 %v1939, %v1940
      %vm1974 = vcmask 1041409
      %v1975 = vsel %vm1974, %v1731, %v1724
      %vm1976 = vcmask 1042434
      %v1977 = vsel %vm1976, %v1738, %v1975
      %vm1978 = vcmask 1043459
      %v1979 = vsel %vm1978, %v1745, %v1977
      %vm1980 = vcmask 1044484
      %v1981 = vsel %vm1980, %v1752, %v1979
      %vm1982 = vcmask 1045509
      %v1983 = vsel %vm1982, %v1759, %v1981
      %vm1984 = vcmask 1046534
      %v1985 = vsel %vm1984, %v1766, %v1983
      %vm1986 = vcmask 1047559
      %v1987 = vsel %vm1986, %v1773, %v1985
      %v1988 = vsel %vm1974, %v1787, %v1780
      %v1989 = vsel %vm1976, %v1794, %v1988
      %v1990 = vsel %vm1978, %v1801, %v1989
      %v1991 = vsel %vm1980, %v1808, %v1990
      %v1992 = vsel %vm1982, %v1815, %v1991
      %v1993 = vsel %vm1984, %v1822, %v1992
      %v1994 = vsel %vm1986, %v1829, %v1993
      %v1995 = vsel %vm1974, %v1843, %v1836
      %v1996 = vsel %vm1976, %v1850, %v1995
      %v1997 = vsel %vm1978, %v1857, %v1996
      %v1998 = vsel %vm1980, %v1864, %v1997
      %v1999 = vsel %vm1982, %v1871, %v1998
      %v2000 = vsel %vm1984, %v1878, %v1999
      %v2001 = vsel %vm1986, %v1885, %v2000
      %v2002 = vsel %vm1974, %v1899, %v1892
      %v2003 = vsel %vm1976, %v1906, %v2002
      %v2004 = vsel %vm1978, %v1913, %v2003
      %v2005 = vsel %vm1980, %v1920, %v2004
      %v2006 = vsel %vm1982, %v1927, %v2005
      %v2007 = vsel %vm1984, %v1934, %v2006
      %v2008 = vsel %vm1986, %v1941, %v2007
      %2013 = vst.msk [vmem:[%s226] sm:$0xff] %vm357, %v1987
      %2014 = vst.msk [vmem:[%s226 + $0x8] sm:$0xff] %vm357, %v1994
      %2015 = vst.msk [vmem:[%s226 + $0x10] sm:$0xff] %vm357, %v2001
      %2016 = vst.msk [vmem:[%s226 + $0x18] sm:$0xff] %vm357, %v2008
      %s2017 = smul.u32 4, %s16
      %p2018 = scmp.lt.s32.totalorder %s2017, 7
      %s2019 = scalar_select %p2018, %s2017, 7
      %s2020 = smul.addr %s2019, 8
      %s2021 = scalar_lea.vmem %s5, %s2020
      // Predicated region
      $region41: #{tpu_custom_call.1} parent=39 // pred_check
        %p2022 = pneg %p144
      $region42: #{tpu_custom_call.1} parent=39 // pred_check_branch
        %2024 = sbr.rel (%p2022) target = $region44
      $region43: #{tpu_custom_call.1} parent=39 // pred_region
        %s2025 = smul.u32 4, %s16
      $region44: #{tpu_custom_call.1} parent=39 // pred_fallthru
        _
    $region40: #{tpu_custom_call.1} parent=5 // pred_fallthru
      _
    %p2026 = scmp.le.s32.totalorder 2, %s11
    // Predicated region
    $region45: #{tpu_custom_call.1} parent=5 // pred_check
      %p2027 = pneg %p2026
    $region46: #{tpu_custom_call.1} parent=5 // pred_check_branch
      %2029 = sbr.rel (%p2027) target = $region48
    $region47: #{tpu_custom_call.1} parent=5 // pred_region
      %s2030 = ssub.s32 %s11, 2
      // Predicated region
      $region49: #{tpu_custom_call.1} parent=47 // pred_check
        %p2031 = pneg %p150
      $region50: #{tpu_custom_call.1} parent=47 // pred_check_branch
        %2033 = sbr.rel (%p2031) target = $region52
      $region51: #{tpu_custom_call.1} parent=47 // pred_region
        %s2034 = smul.u32 4, %s17
        %p2035 = scmp.lt.s32.totalorder %s2034, 7
        %s2036 = scalar_select %p2035, %s2034, 7
        %s2037 = smul.addr %s2036, 8
        %s2038 = scalar_lea.vmem %s5, %s2037
      $region52: #{tpu_custom_call.1} parent=47 // pred_fallthru
        _
    $region48: #{tpu_custom_call.1} parent=5 // pred_fallthru
      _
  $region6: #{tpu_custom_call.1} parent=0 // loop_footer
    %s15 = sadd.s32 1, %s11
  $region7: #{tpu_custom_call.1} parent=0 // loop_footer_branch
    %10 = sbr.rel target = $region3
  $region8: #{tpu_custom_call.1} parent=0 // loop_exit
    _

</llo_original>
